<compile_context>
chip_gen: v7x
topology: tpu7x:2x2x1
jax: 0.10.0
libtpu: 0.0.40
codegen_flags: <defaults>
</compile_context>

<pallas_src>
import jax
import jax.numpy as jnp
from jax import lax
from jax.experimental import pallas as pl
from jax.experimental.pallas import tpu as pltpu

# Small, deterministic model hyper-parameters (synthetic stand-ins for the
# original 100 / 256 / 128 sizes — structure is identical).
VOCAB_SIZE = 50
EMBEDDING_DIM = 16          # E  (word emb and "upper" emb dims)
HIDDEN_DIM = 32             # H  (per-direction LSTM hidden)
LINEAR_OUTPUT_DIM = 16      # D1
NUM_TAGS = 9
BATCH = 2
SEQ = 8


# ----------------------------------------------------------------------------
# Pallas kernel
# ----------------------------------------------------------------------------
def bilstm_kernel(x_ref,                      # (T, B, 4E)  [x(t) | x(T-1-t)]
                  wih_ref,                    # (4E, 8H) block-diag, gate-grouped
                  bih_ref,                    # (1, 8H)  b_ih + b_hh, gate-grouped
                  whh_ref,                    # (2H, 8H) block-diag, gate-grouped
                  w1_ref, b1_ref,             # linear1 (2H, D1), (1, D1)
                  w2_ref, b2_ref,             # linear2 (D1, num_tags), (1, num_tags)
                  out_ref,                    # (T*B, num_tags)
                  xproj_ref,                  # scratch (T, B, 8H)
                  hcat_ref):                  # scratch (T, B, 2H) = [h_fwd | h_bwd]
    T, B, Din = x_ref.shape
    H2 = hcat_ref.shape[-1]                   # 2H
    H = H2 // 2
    G = xproj_ref.shape[-1]                   # 8H

    whh = whh_ref[...]
    w1 = w1_ref[...]
    b1 = b1_ref[...]
    w2 = w2_ref[...]
    b2 = b2_ref[...]

    # ---- 1) batched input projection: all timesteps, both directions, one MXU
    #         call; biases folded in so the recurrence has no bias add. --------
    x2 = x_ref[...].reshape(T * B, Din)
    xproj = (jnp.dot(x2, wih_ref[...], preferred_element_type=jnp.float32)
             + bih_ref[...])
    xproj_ref[...] = xproj.reshape(T, B, G)

    # ---- 2) fused forward+backward recurrence ------------------------------
    # Carry holds both directions side by side:  h = [h_fwd | h_bwd]  (B, 2H).
    # Gate columns are grouped by type: [i(2H), f(2H), o(2H), g(2H)], each 2H
    # block itself laid out [fwd | bwd], so the cell update is pure element-wise
    # math on (B, 2H) blocks with a single contiguous sigmoid and tanh slice.
    h0 = jnp.zeros((B, H2), jnp.float32)
    c0 = jnp.zeros((B, H2), jnp.float32)

    def step(i, carry):
        h, c = carry
        gates = xproj_ref[i] + jnp.dot(h, whh,
                                       preferred_element_type=jnp.float32)
        s = jax.nn.sigmoid(gates[:, :3 * H2])          # [i | f | o], one EUP pass
        g = jnp.tanh(gates[:, 3 * H2:])                # [g]
        c = s[:, H2:2 * H2] * c + s[:, :H2] * g
        h = s[:, 2 * H2:3 * H2] * jnp.tanh(c)
        # forward hidden belongs to time i, backward hidden to time T-1-i
        hcat_ref[i, :, :H] = h[:, :H]
        hcat_ref[T - 1 - i, :, H:] = h[:, H:]
        return (h, c)

    lax.fori_loop(0, T, step, (h0, c0), unroll=True)

    # ---- 3) hoisted head: linear1 -> ELU -> dropout(identity) -> linear2 ----
    h_all = hcat_ref[...].reshape(T * B, H2)
    z1 = jnp.dot(h_all, w1, preferred_element_type=jnp.float32) + b1
    a1 = jnp.where(z1 > 0, z1, jnp.exp(jnp.minimum(z1, 0.0)) - 1.0)   # ELU(1.0)
    # dropout(p=0.33): identity at inference (nn.Dropout eval mode)
    out_ref[...] = jnp.dot(a1, w2, preferred_element_type=jnp.float32) + b2


def bilstm_pallas(x_dual, kp):
    """x_dual: (T, Bp, 4E) float32 -> logits (T*Bp, NUM_TAGS) float32."""
    T, Bp, _ = x_dual.shape
    H = HIDDEN_DIM

    def full_spec(shape):
        nd = len(shape)
        return pl.BlockSpec(shape, lambda i, nd=nd: (0,) * nd)

    in_arrays = [x_dual, kp["wih"], kp["bih"], kp["whh"],
                 kp["w1"], kp["b1"], kp["w2"], kp["b2"]]
    in_specs = [full_spec(a.shape) for a in in_arrays]

    return pl.pallas_call(
        bilstm_kernel,
        out_shape=jax.ShapeDtypeStruct((T * Bp, NUM_TAGS), jnp.float32),
        grid=(1,),
        in_specs=in_specs,
        out_specs=full_spec((T * Bp, NUM_TAGS)),
        scratch_shapes=[
            pltpu.VMEM((T, Bp, 8 * H), jnp.float32),   # precomputed gate projections
            pltpu.VMEM((T, Bp, 2 * H), jnp.float32),   # [h_fwd | h_bwd] per timestep
        ],
        compiler_params=pltpu.CompilerParams(
            dimension_semantics=("arbitrary",)),
    )(*in_arrays)


# ----------------------------------------------------------------------------
# Host-side weight fusion (layout glue, done once)
# ----------------------------------------------------------------------------
_H = HIDDEN_DIM
# PyTorch gate order is (i, f, g, o); we regroup columns as (i, f, o, g) so the
# three sigmoid gates are contiguous and tanh gets one contiguous slice.
_GATE_SLICES = (slice(0, _H), slice(_H, 2 * _H),
                slice(3 * _H, 4 * _H), slice(2 * _H, 3 * _H))   # i, f, o, g


def _fuse_gate_matrix(wf, wb):
    """Build a block-diagonal (din_f+din_b, 8H) matrix whose columns are grouped
    by gate type: [i_f,i_b, f_f,f_b, o_f,o_b, g_f,g_b]."""
    zf = jnp.zeros((wf.shape[0], _H), jnp.float32)
    zb = jnp.zeros((wb.shape[0], _H), jnp.float32)
    cols = []
    for sl in _GATE_SLICES:
        cols.append(jnp.concatenate([wf[:, sl], zb], axis=0))   # fwd column block
        cols.append(jnp.concatenate([zf, wb[:, sl]], axis=0))   # bwd column block
    return jnp.concatenate(cols, axis=1)


def _fuse_gate_bias(bf, bb):
    parts = []
    for sl in _GATE_SLICES:
        parts.append(bf[:, sl])
        parts.append(bb[:, sl])
    return jnp.concatenate(parts, axis=1)


def build_kernel_params(params):
    return dict(
        wih=_fuse_gate_matrix(params["wih_f"], params["wih_b"]),   # (4E, 8H)
        bih=_fuse_gate_bias(params["b_f"], params["b_b"]),         # (1, 8H)
        whh=_fuse_gate_matrix(params["whh_f"], params["whh_b"]),   # (2H, 8H)
        w1=params["w1"], b1=params["b1"],
        w2=params["w2"], b2=params["b2"],
    )


# ----------------------------------------------------------------------------
# Forward wrappers
# ----------------------------------------------------------------------------
def forward(params, x_ids, upper_ids):
    """Batch-first forward matching BiLSTM.forward(x, upper_x)."""
    B0, T = x_ids.shape
    xe = params["emb"][x_ids]             # (B, T, E)  embedding gather (glue)
    ue = params["upper_emb"][upper_ids]   # (B, T, E)
    x = jnp.concatenate([xe, ue], axis=-1)                     # (B, T, 2E)
    x_tm = jnp.transpose(x, (1, 0, 2)).astype(jnp.float32)     # (T, B, 2E)

    # Pad batch up to a full sublane group (8) — free, keeps vregs/MXU rows dense.
    Bp = -(-B0 // 8) * 8
    if Bp != B0:
        x_tm = jnp.pad(x_tm, ((0, 0), (0, Bp - B0), (0, 0)))

    # Time-reversed copy along features so one projection row carries both the
    # forward step-t and backward step-(T-1-t) gate inputs.
    x_dual = jnp.concatenate([x_tm, x_tm[::-1]], axis=-1)      # (T, Bp, 4E)

    kp = build_kernel_params(params)
    logits_flat = bilstm_pallas(x_dual, kp)                    # (T*Bp, num_tags)
    logits_tm = logits_flat.reshape(T, Bp, NUM_TAGS)[:, :B0]   # drop batch pad
    return jnp.transpose(logits_tm, (1, 0, 2))                 # (B, T, num_tags)


def forward_ref(params, x_ids, upper_ids):
    """Pure-JAX reference of the same forward, for a correctness check."""
    H = HIDDEN_DIM
    xe = params["emb"][x_ids]
    ue = params["upper_emb"][upper_ids]
    x = jnp.concatenate([xe, ue], axis=-1)
    x_tm = jnp.transpose(x, (1, 0, 2)).astype(jnp.float32)     # (T, B, 2E)
    B = x.shape[0]

    def cell(carry, x_t, wih, whh, b):
        h, c = carry
        gates = x_t @ wih + h @ whh + b
        i = jax.nn.sigmoid(gates[:, :H])
        f = jax.nn.sigmoid(gates[:, H:2 * H])
        g = jnp.tanh(gates[:, 2 * H:3 * H])
        o = jax.nn.sigmoid(gates[:, 3 * H:])
        c = f * c + i * g
        h = o * jnp.tanh(c)
        return (h, c), h

    init = (jnp.zeros((B, H), jnp.float32), jnp.zeros((B, H), jnp.float32))
    _, hf = lax.scan(
        lambda car, xt: cell(car, xt, params["wih_f"], params["whh_f"], params["b_f"]),
        init, x_tm)
    _, hb_rev = lax.scan(
        lambda car, xt: cell(car, xt, params["wih_b"], params["whh_b"], params["b_b"]),
        init, x_tm[::-1])
    hb = hb_rev[::-1]
    h = jnp.concatenate([hf, hb], axis=-1)                     # (T, B, 2H)
    z1 = h @ params["w1"] + params["b1"]
    a1 = jnp.where(z1 > 0, z1, jnp.exp(jnp.minimum(z1, 0.0)) - 1.0)
    logits = a1 @ params["w2"] + params["b2"]
    return jnp.transpose(logits, (1, 0, 2))


def init_params(key):
    ks = jax.random.split(key, 12)
    E, H, D1 = EMBEDDING_DIM, HIDDEN_DIM, LINEAR_OUTPUT_DIM

    def u(k, shape, s=0.1):
        return jax.random.uniform(k, shape, jnp.float32, -s, s)

    return dict(
        # stands in for (frozen) pretrained GloVe embeddings
        emb=u(ks[0], (VOCAB_SIZE, E), 0.5),
        upper_emb=u(ks[1], (2, E), 0.5),
        # LSTM weights stored pre-transposed: (in, 4H) / (H, 4H); bias = b_ih + b_hh
        wih_f=u(ks[2], (2 * E, 4 * H)),
        whh_f=u(ks[3], (H, 4 * H)),
        b_f=u(ks[4], (1, 4 * H)),
        wih_b=u(ks[5], (2 * E, 4 * H)),
        whh_b=u(ks[6], (H, 4 * H)),
        b_b=u(ks[7], (1, 4 * H)),
        # linear layers stored as (in, out)
        w1=u(ks[8], (2 * H, D1)),
        b1=u(ks[9], (1, D1)),
        w2=u(ks[10], (D1, NUM_TAGS)),
        b2=u(ks[11], (1, NUM_TAGS)),
    )


if __name__ == "__main__":
    key = jax.random.PRNGKey(0)
    pkey, xkey, ukey = jax.random.split(key, 3)
    params = init_params(pkey)

    x_ids = jax.random.randint(xkey, (BATCH, SEQ), 0, VOCAB_SIZE, dtype=jnp.int32)
    upper_ids = jax.random.randint(ukey, (BATCH, SEQ), 0, 2, dtype=jnp.int32)

    logits = jax.jit(forward)(params, x_ids, upper_ids)
    logits = jax.block_until_ready(logits)

    ref = forward_ref(params, x_ids, upper_ids)
    assert logits.shape == (BATCH, SEQ, NUM_TAGS)
    assert float(jnp.max(jnp.abs(logits - ref))) < 1e-4

    # TODO(synk): dropout is modeled as inference-mode identity (no RNG mask).
    print("KERNEL_OK")
</pallas_src>

<mosaic_0001>
module attributes {stable_mosaic.version = 11 : i64} {
  func.func @bilstm_kernel(%arg0: i32, %arg1: memref<8x8x64xf32, #tpu.memory_space<vmem>>, %arg2: memref<64x256xf32, #tpu.memory_space<vmem>>, %arg3: memref<1x256xf32, #tpu.memory_space<vmem>>, %arg4: memref<64x256xf32, #tpu.memory_space<vmem>>, %arg5: memref<64x16xf32, #tpu.memory_space<vmem>>, %arg6: memref<1x16xf32, #tpu.memory_space<vmem>>, %arg7: memref<16x9xf32, #tpu.memory_space<vmem>>, %arg8: memref<1x9xf32, #tpu.memory_space<vmem>>, %arg9: memref<64x9xf32, #tpu.memory_space<vmem>>, %arg10: memref<8x8x256xf32, #tpu.memory_space<vmem>>, %arg11: memref<8x8x64xf32, #tpu.memory_space<vmem>>) attributes {dimension_semantics = [#tpu.dimension_semantics<arbitrary>], iteration_bounds = array<i64: 1>, scalar_prefetch = 0 : i64, scratch_operands = 2 : i64, tpu.core_type = #tpu.core_type<tc>, window_params = [{pipeline_mode = #tpu.pipeline_mode<synchronous>, transform_indices = @transform_0, window_bounds = array<i64: 8, 8, 64>}, {pipeline_mode = #tpu.pipeline_mode<synchronous>, transform_indices = @transform_1, window_bounds = array<i64: 64, 256>}, {pipeline_mode = #tpu.pipeline_mode<synchronous>, transform_indices = @transform_2, window_bounds = array<i64: 1, 256>}, {pipeline_mode = #tpu.pipeline_mode<synchronous>, transform_indices = @transform_3, window_bounds = array<i64: 64, 256>}, {pipeline_mode = #tpu.pipeline_mode<synchronous>, transform_indices = @transform_4, window_bounds = array<i64: 64, 16>}, {pipeline_mode = #tpu.pipeline_mode<synchronous>, transform_indices = @transform_5, window_bounds = array<i64: 1, 16>}, {pipeline_mode = #tpu.pipeline_mode<synchronous>, transform_indices = @transform_6, window_bounds = array<i64: 16, 9>}, {pipeline_mode = #tpu.pipeline_mode<synchronous>, transform_indices = @transform_7, window_bounds = array<i64: 1, 9>}, {pipeline_mode = #tpu.pipeline_mode<synchronous>, transform_indices = @transform_8, window_bounds = array<i64: 64, 9>}]} {
    %c0 = arith.constant 0 : index
    %c0_0 = arith.constant 0 : index
    %0 = vector.load %arg4[%c0, %c0_0] : memref<64x256xf32, #tpu.memory_space<vmem>>, vector<64x256xf32>
    %c0_1 = arith.constant 0 : index
    %c0_2 = arith.constant 0 : index
    %1 = vector.load %arg5[%c0_1, %c0_2] : memref<64x16xf32, #tpu.memory_space<vmem>>, vector<64x16xf32>
    %c0_3 = arith.constant 0 : index
    %c0_4 = arith.constant 0 : index
    %2 = vector.load %arg6[%c0_3, %c0_4] : memref<1x16xf32, #tpu.memory_space<vmem>>, vector<1x16xf32>
    %c0_5 = arith.constant 0 : index
    %c0_6 = arith.constant 0 : index
    %3 = vector.load %arg7[%c0_5, %c0_6] : memref<16x9xf32, #tpu.memory_space<vmem>>, vector<16x9xf32>
    %c0_7 = arith.constant 0 : index
    %c0_8 = arith.constant 0 : index
    %4 = vector.load %arg8[%c0_7, %c0_8] : memref<1x9xf32, #tpu.memory_space<vmem>>, vector<1x9xf32>
    %c0_9 = arith.constant 0 : index
    %c0_10 = arith.constant 0 : index
    %c0_11 = arith.constant 0 : index
    %5 = vector.load %arg1[%c0_9, %c0_10, %c0_11] : memref<8x8x64xf32, #tpu.memory_space<vmem>>, vector<8x8x64xf32>
    %6 = vector.shape_cast %5 : vector<8x8x64xf32> to vector<64x64xf32>
    %c0_12 = arith.constant 0 : index
    %c0_13 = arith.constant 0 : index
    %7 = vector.load %arg2[%c0_12, %c0_13] : memref<64x256xf32, #tpu.memory_space<vmem>>, vector<64x256xf32>
    %cst = arith.constant dense<0.000000e+00> : vector<64x256xf32>
    %8 = tpu.matmul %6, %7, %cst {dimension_numbers = #tpu.dot_dimension_numbers<[1], [0], [0], [1], [0, 0, 1, 1], [], []>} : vector<64x64xf32>, vector<64x256xf32>, vector<64x256xf32> -> vector<64x256xf32>
    %c0_14 = arith.constant 0 : index
    %c0_15 = arith.constant 0 : index
    %9 = vector.load %arg3[%c0_14, %c0_15] : memref<1x256xf32, #tpu.memory_space<vmem>>, vector<1x256xf32>
    %10 = vector.broadcast %9 : vector<1x256xf32> to vector<64x256xf32>
    %11 = arith.addf %8, %10 : vector<64x256xf32>
    %12 = vector.shape_cast %11 : vector<64x256xf32> to vector<8x8x256xf32>
    %c0_16 = arith.constant 0 : index
    %c0_17 = arith.constant 0 : index
    %c0_18 = arith.constant 0 : index
    %13 = vector.load %arg10[%c0_16, %c0_17, %c0_18] : memref<8x8x256xf32, #tpu.memory_space<vmem>>, vector<8x8x256xf32>
    tpu.vector_store %arg10[%c0_16, %c0_17, %c0_18], %12 {strides = array<i32>} : memref<8x8x256xf32, #tpu.memory_space<vmem>>, vector<8x8x256xf32>,
    %cst_19 = arith.constant 0.000000e+00 : f32
    %14 = vector.broadcast %cst_19 : f32 to vector<8x64xf32>
    %cst_20 = arith.constant 0.000000e+00 : f32
    %15 = vector.broadcast %cst_20 : f32 to vector<8x64xf32>
    %c0_i32 = arith.constant 0 : i32
    %16 = arith.index_cast %c0_i32 : i32 to index
    %c0_21 = arith.constant 0 : index
    %c0_22 = arith.constant 0 : index
    %17 = vector.load %arg10[%16, %c0_21, %c0_22] : memref<8x8x256xf32, #tpu.memory_space<vmem>>, vector<1x8x256xf32>
    %18 = vector.shape_cast %17 : vector<1x8x256xf32> to vector<8x256xf32>
    %cst_23 = arith.constant dense<0.000000e+00> : vector<8x256xf32>
    %19 = tpu.matmul %14, %0, %cst_23 {dimension_numbers = #tpu.dot_dimension_numbers<[1], [0], [0], [1], [0, 0, 1, 1], [], []>} : vector<8x64xf32>, vector<64x256xf32>, vector<8x256xf32> -> vector<8x256xf32>
    %20 = arith.addf %18, %19 : vector<8x256xf32>
    %21 = vector.extract_strided_slice %20 {offsets = [0, 0], sizes = [8, 192], strides = [1, 1]} : vector<8x256xf32> to vector<8x192xf32>
    %22 = arith.negf %21 : vector<8x192xf32>
    %23 = math.exp %22 : vector<8x192xf32>
    %cst_24 = arith.constant 1.000000e+00 : f32
    %24 = vector.broadcast %cst_24 : f32 to vector<8x192xf32>
    %25 = arith.addf %24, %23 : vector<8x192xf32>
    %26 = arith.divf %24, %25 : vector<8x192xf32>
    %27 = vector.extract_strided_slice %20 {offsets = [0, 192], sizes = [8, 64], strides = [1, 1]} : vector<8x256xf32> to vector<8x64xf32>
    %28 = math.tanh %27 : vector<8x64xf32>
    %29 = vector.extract_strided_slice %26 {offsets = [0, 64], sizes = [8, 64], strides = [1, 1]} : vector<8x192xf32> to vector<8x64xf32>
    %30 = arith.mulf %29, %15 : vector<8x64xf32>
    %31 = vector.extract_strided_slice %26 {offsets = [0, 0], sizes = [8, 64], strides = [1, 1]} : vector<8x192xf32> to vector<8x64xf32>
    %32 = arith.mulf %31, %28 : vector<8x64xf32>
    %33 = arith.addf %30, %32 : vector<8x64xf32>
    %34 = vector.extract_strided_slice %26 {offsets = [0, 128], sizes = [8, 64], strides = [1, 1]} : vector<8x192xf32> to vector<8x64xf32>
    %35 = math.tanh %33 : vector<8x64xf32>
    %36 = arith.mulf %34, %35 : vector<8x64xf32>
    %37 = vector.extract_strided_slice %36 {offsets = [0, 0], sizes = [8, 32], strides = [1, 1]} : vector<8x64xf32> to vector<8x32xf32>
    %38 = arith.index_cast %c0_i32 : i32 to index
    %c0_25 = arith.constant 0 : index
    %c0_26 = arith.constant 0 : index
    %39 = vector.load %arg11[%38, %c0_25, %c0_26] : memref<8x8x64xf32, #tpu.memory_space<vmem>>, vector<1x8x32xf32>
    %40 = vector.shape_cast %39 : vector<1x8x32xf32> to vector<8x32xf32>
    %41 = vector.shape_cast %37 : vector<8x32xf32> to vector<1x8x32xf32>
    tpu.vector_store %arg11[%38, %c0_25, %c0_26], %41 {strides = array<i32>} : memref<8x8x64xf32, #tpu.memory_space<vmem>>, vector<1x8x32xf32>,
    %42 = vector.extract_strided_slice %36 {offsets = [0, 32], sizes = [8, 32], strides = [1, 1]} : vector<8x64xf32> to vector<8x32xf32>
    %c7_i32 = arith.constant 7 : i32
    %43 = arith.subi %c7_i32, %c0_i32 : i32
    %44 = arith.index_cast %43 : i32 to index
    %c0_27 = arith.constant 0 : index
    %c32 = arith.constant 32 : index
    %45 = vector.load %arg11[%44, %c0_27, %c32] : memref<8x8x64xf32, #tpu.memory_space<vmem>>, vector<1x8x32xf32>
    %46 = vector.shape_cast %45 : vector<1x8x32xf32> to vector<8x32xf32>
    %47 = vector.shape_cast %42 : vector<8x32xf32> to vector<1x8x32xf32>
    tpu.vector_store %arg11[%44, %c0_27, %c32], %47 {strides = array<i32>} : memref<8x8x64xf32, #tpu.memory_space<vmem>>, vector<1x8x32xf32>,
    %c1_i32 = arith.constant 1 : i32
    %48 = arith.index_cast %c1_i32 : i32 to index
    %c0_28 = arith.constant 0 : index
    %c0_29 = arith.constant 0 : index
    %49 = vector.load %arg10[%48, %c0_28, %c0_29] : memref<8x8x256xf32, #tpu.memory_space<vmem>>, vector<1x8x256xf32>
    %50 = vector.shape_cast %49 : vector<1x8x256xf32> to vector<8x256xf32>
    %cst_30 = arith.constant dense<0.000000e+00> : vector<8x256xf32>
    %51 = tpu.matmul %36, %0, %cst_30 {dimension_numbers = #tpu.dot_dimension_numbers<[1], [0], [0], [1], [0, 0, 1, 1], [], []>} : vector<8x64xf32>, vector<64x256xf32>, vector<8x256xf32> -> vector<8x256xf32>
    %52 = arith.addf %50, %51 : vector<8x256xf32>
    %53 = vector.extract_strided_slice %52 {offsets = [0, 0], sizes = [8, 192], strides = [1, 1]} : vector<8x256xf32> to vector<8x192xf32>
    %54 = arith.negf %53 : vector<8x192xf32>
    %55 = math.exp %54 : vector<8x192xf32>
    %cst_31 = arith.constant 1.000000e+00 : f32
    %56 = vector.broadcast %cst_31 : f32 to vector<8x192xf32>
    %57 = arith.addf %56, %55 : vector<8x192xf32>
    %58 = arith.divf %56, %57 : vector<8x192xf32>
    %59 = vector.extract_strided_slice %52 {offsets = [0, 192], sizes = [8, 64], strides = [1, 1]} : vector<8x256xf32> to vector<8x64xf32>
    %60 = math.tanh %59 : vector<8x64xf32>
    %61 = vector.extract_strided_slice %58 {offsets = [0, 64], sizes = [8, 64], strides = [1, 1]} : vector<8x192xf32> to vector<8x64xf32>
    %62 = arith.mulf %61, %33 : vector<8x64xf32>
    %63 = vector.extract_strided_slice %58 {offsets = [0, 0], sizes = [8, 64], strides = [1, 1]} : vector<8x192xf32> to vector<8x64xf32>
    %64 = arith.mulf %63, %60 : vector<8x64xf32>
    %65 = arith.addf %62, %64 : vector<8x64xf32>
    %66 = vector.extract_strided_slice %58 {offsets = [0, 128], sizes = [8, 64], strides = [1, 1]} : vector<8x192xf32> to vector<8x64xf32>
    %67 = math.tanh %65 : vector<8x64xf32>
    %68 = arith.mulf %66, %67 : vector<8x64xf32>
    %69 = vector.extract_strided_slice %68 {offsets = [0, 0], sizes = [8, 32], strides = [1, 1]} : vector<8x64xf32> to vector<8x32xf32>
    %70 = arith.index_cast %c1_i32 : i32 to index
    %c0_32 = arith.constant 0 : index
    %c0_33 = arith.constant 0 : index
    %71 = vector.load %arg11[%70, %c0_32, %c0_33] : memref<8x8x64xf32, #tpu.memory_space<vmem>>, vector<1x8x32xf32>
    %72 = vector.shape_cast %71 : vector<1x8x32xf32> to vector<8x32xf32>
    %73 = vector.shape_cast %69 : vector<8x32xf32> to vector<1x8x32xf32>
    tpu.vector_store %arg11[%70, %c0_32, %c0_33], %73 {strides = array<i32>} : memref<8x8x64xf32, #tpu.memory_space<vmem>>, vector<1x8x32xf32>,
    %74 = vector.extract_strided_slice %68 {offsets = [0, 32], sizes = [8, 32], strides = [1, 1]} : vector<8x64xf32> to vector<8x32xf32>
    %c7_i32_34 = arith.constant 7 : i32
    %75 = arith.subi %c7_i32_34, %c1_i32 : i32
    %76 = arith.index_cast %75 : i32 to index
    %c0_35 = arith.constant 0 : index
    %c32_36 = arith.constant 32 : index
    %77 = vector.load %arg11[%76, %c0_35, %c32_36] : memref<8x8x64xf32, #tpu.memory_space<vmem>>, vector<1x8x32xf32>
    %78 = vector.shape_cast %77 : vector<1x8x32xf32> to vector<8x32xf32>
    %79 = vector.shape_cast %74 : vector<8x32xf32> to vector<1x8x32xf32>
    tpu.vector_store %arg11[%76, %c0_35, %c32_36], %79 {strides = array<i32>} : memref<8x8x64xf32, #tpu.memory_space<vmem>>, vector<1x8x32xf32>,
    %c2_i32 = arith.constant 2 : i32
    %80 = arith.index_cast %c2_i32 : i32 to index
    %c0_37 = arith.constant 0 : index
    %c0_38 = arith.constant 0 : index
    %81 = vector.load %arg10[%80, %c0_37, %c0_38] : memref<8x8x256xf32, #tpu.memory_space<vmem>>, vector<1x8x256xf32>
    %82 = vector.shape_cast %81 : vector<1x8x256xf32> to vector<8x256xf32>
    %cst_39 = arith.constant dense<0.000000e+00> : vector<8x256xf32>
    %83 = tpu.matmul %68, %0, %cst_39 {dimension_numbers = #tpu.dot_dimension_numbers<[1], [0], [0], [1], [0, 0, 1, 1], [], []>} : vector<8x64xf32>, vector<64x256xf32>, vector<8x256xf32> -> vector<8x256xf32>
    %84 = arith.addf %82, %83 : vector<8x256xf32>
    %85 = vector.extract_strided_slice %84 {offsets = [0, 0], sizes = [8, 192], strides = [1, 1]} : vector<8x256xf32> to vector<8x192xf32>
    %86 = arith.negf %85 : vector<8x192xf32>
    %87 = math.exp %86 : vector<8x192xf32>
    %cst_40 = arith.constant 1.000000e+00 : f32
    %88 = vector.broadcast %cst_40 : f32 to vector<8x192xf32>
    %89 = arith.addf %88, %87 : vector<8x192xf32>
    %90 = arith.divf %88, %89 : vector<8x192xf32>
    %91 = vector.extract_strided_slice %84 {offsets = [0, 192], sizes = [8, 64], strides = [1, 1]} : vector<8x256xf32> to vector<8x64xf32>
    %92 = math.tanh %91 : vector<8x64xf32>
    %93 = vector.extract_strided_slice %90 {offsets = [0, 64], sizes = [8, 64], strides = [1, 1]} : vector<8x192xf32> to vector<8x64xf32>
    %94 = arith.mulf %93, %65 : vector<8x64xf32>
    %95 = vector.extract_strided_slice %90 {offsets = [0, 0], sizes = [8, 64], strides = [1, 1]} : vector<8x192xf32> to vector<8x64xf32>
    %96 = arith.mulf %95, %92 : vector<8x64xf32>
    %97 = arith.addf %94, %96 : vector<8x64xf32>
    %98 = vector.extract_strided_slice %90 {offsets = [0, 128], sizes = [8, 64], strides = [1, 1]} : vector<8x192xf32> to vector<8x64xf32>
    %99 = math.tanh %97 : vector<8x64xf32>
    %100 = arith.mulf %98, %99 : vector<8x64xf32>
    %101 = vector.extract_strided_slice %100 {offsets = [0, 0], sizes = [8, 32], strides = [1, 1]} : vector<8x64xf32> to vector<8x32xf32>
    %102 = arith.index_cast %c2_i32 : i32 to index
    %c0_41 = arith.constant 0 : index
    %c0_42 = arith.constant 0 : index
    %103 = vector.load %arg11[%102, %c0_41, %c0_42] : memref<8x8x64xf32, #tpu.memory_space<vmem>>, vector<1x8x32xf32>
    %104 = vector.shape_cast %103 : vector<1x8x32xf32> to vector<8x32xf32>
    %105 = vector.shape_cast %101 : vector<8x32xf32> to vector<1x8x32xf32>
    tpu.vector_store %arg11[%102, %c0_41, %c0_42], %105 {strides = array<i32>} : memref<8x8x64xf32, #tpu.memory_space<vmem>>, vector<1x8x32xf32>,
    %106 = vector.extract_strided_slice %100 {offsets = [0, 32], sizes = [8, 32], strides = [1, 1]} : vector<8x64xf32> to vector<8x32xf32>
    %c7_i32_43 = arith.constant 7 : i32
    %107 = arith.subi %c7_i32_43, %c2_i32 : i32
    %108 = arith.index_cast %107 : i32 to index
    %c0_44 = arith.constant 0 : index
    %c32_45 = arith.constant 32 : index
    %109 = vector.load %arg11[%108, %c0_44, %c32_45] : memref<8x8x64xf32, #tpu.memory_space<vmem>>, vector<1x8x32xf32>
    %110 = vector.shape_cast %109 : vector<1x8x32xf32> to vector<8x32xf32>
    %111 = vector.shape_cast %106 : vector<8x32xf32> to vector<1x8x32xf32>
    tpu.vector_store %arg11[%108, %c0_44, %c32_45], %111 {strides = array<i32>} : memref<8x8x64xf32, #tpu.memory_space<vmem>>, vector<1x8x32xf32>,
    %c3_i32 = arith.constant 3 : i32
    %112 = arith.index_cast %c3_i32 : i32 to index
    %c0_46 = arith.constant 0 : index
    %c0_47 = arith.constant 0 : index
    %113 = vector.load %arg10[%112, %c0_46, %c0_47] : memref<8x8x256xf32, #tpu.memory_space<vmem>>, vector<1x8x256xf32>
    %114 = vector.shape_cast %113 : vector<1x8x256xf32> to vector<8x256xf32>
    %cst_48 = arith.constant dense<0.000000e+00> : vector<8x256xf32>
    %115 = tpu.matmul %100, %0, %cst_48 {dimension_numbers = #tpu.dot_dimension_numbers<[1], [0], [0], [1], [0, 0, 1, 1], [], []>} : vector<8x64xf32>, vector<64x256xf32>, vector<8x256xf32> -> vector<8x256xf32>
    %116 = arith.addf %114, %115 : vector<8x256xf32>
    %117 = vector.extract_strided_slice %116 {offsets = [0, 0], sizes = [8, 192], strides = [1, 1]} : vector<8x256xf32> to vector<8x192xf32>
    %118 = arith.negf %117 : vector<8x192xf32>
    %119 = math.exp %118 : vector<8x192xf32>
    %cst_49 = arith.constant 1.000000e+00 : f32
    %120 = vector.broadcast %cst_49 : f32 to vector<8x192xf32>
    %121 = arith.addf %120, %119 : vector<8x192xf32>
    %122 = arith.divf %120, %121 : vector<8x192xf32>
    %123 = vector.extract_strided_slice %116 {offsets = [0, 192], sizes = [8, 64], strides = [1, 1]} : vector<8x256xf32> to vector<8x64xf32>
    %124 = math.tanh %123 : vector<8x64xf32>
    %125 = vector.extract_strided_slice %122 {offsets = [0, 64], sizes = [8, 64], strides = [1, 1]} : vector<8x192xf32> to vector<8x64xf32>
    %126 = arith.mulf %125, %97 : vector<8x64xf32>
    %127 = vector.extract_strided_slice %122 {offsets = [0, 0], sizes = [8, 64], strides = [1, 1]} : vector<8x192xf32> to vector<8x64xf32>
    %128 = arith.mulf %127, %124 : vector<8x64xf32>
    %129 = arith.addf %126, %128 : vector<8x64xf32>
    %130 = vector.extract_strided_slice %122 {offsets = [0, 128], sizes = [8, 64], strides = [1, 1]} : vector<8x192xf32> to vector<8x64xf32>
    %131 = math.tanh %129 : vector<8x64xf32>
    %132 = arith.mulf %130, %131 : vector<8x64xf32>
    %133 = vector.extract_strided_slice %132 {offsets = [0, 0], sizes = [8, 32], strides = [1, 1]} : vector<8x64xf32> to vector<8x32xf32>
    %134 = arith.index_cast %c3_i32 : i32 to index
    %c0_50 = arith.constant 0 : index
    %c0_51 = arith.constant 0 : index
    %135 = vector.load %arg11[%134, %c0_50, %c0_51] : memref<8x8x64xf32, #tpu.memory_space<vmem>>, vector<1x8x32xf32>
    %136 = vector.shape_cast %135 : vector<1x8x32xf32> to vector<8x32xf32>
    %137 = vector.shape_cast %133 : vector<8x32xf32> to vector<1x8x32xf32>
    tpu.vector_store %arg11[%134, %c0_50, %c0_51], %137 {strides = array<i32>} : memref<8x8x64xf32, #tpu.memory_space<vmem>>, vector<1x8x32xf32>,
    %138 = vector.extract_strided_slice %132 {offsets = [0, 32], sizes = [8, 32], strides = [1, 1]} : vector<8x64xf32> to vector<8x32xf32>
    %c7_i32_52 = arith.constant 7 : i32
    %139 = arith.subi %c7_i32_52, %c3_i32 : i32
    %140 = arith.index_cast %139 : i32 to index
    %c0_53 = arith.constant 0 : index
    %c32_54 = arith.constant 32 : index
    %141 = vector.load %arg11[%140, %c0_53, %c32_54] : memref<8x8x64xf32, #tpu.memory_space<vmem>>, vector<1x8x32xf32>
    %142 = vector.shape_cast %141 : vector<1x8x32xf32> to vector<8x32xf32>
    %143 = vector.shape_cast %138 : vector<8x32xf32> to vector<1x8x32xf32>
    tpu.vector_store %arg11[%140, %c0_53, %c32_54], %143 {strides = array<i32>} : memref<8x8x64xf32, #tpu.memory_space<vmem>>, vector<1x8x32xf32>,
    %c4_i32 = arith.constant 4 : i32
    %144 = arith.index_cast %c4_i32 : i32 to index
    %c0_55 = arith.constant 0 : index
    %c0_56 = arith.constant 0 : index
    %145 = vector.load %arg10[%144, %c0_55, %c0_56] : memref<8x8x256xf32, #tpu.memory_space<vmem>>, vector<1x8x256xf32>
    %146 = vector.shape_cast %145 : vector<1x8x256xf32> to vector<8x256xf32>
    %cst_57 = arith.constant dense<0.000000e+00> : vector<8x256xf32>
    %147 = tpu.matmul %132, %0, %cst_57 {dimension_numbers = #tpu.dot_dimension_numbers<[1], [0], [0], [1], [0, 0, 1, 1], [], []>} : vector<8x64xf32>, vector<64x256xf32>, vector<8x256xf32> -> vector<8x256xf32>
    %148 = arith.addf %146, %147 : vector<8x256xf32>
    %149 = vector.extract_strided_slice %148 {offsets = [0, 0], sizes = [8, 192], strides = [1, 1]} : vector<8x256xf32> to vector<8x192xf32>
    %150 = arith.negf %149 : vector<8x192xf32>
    %151 = math.exp %150 : vector<8x192xf32>
    %cst_58 = arith.constant 1.000000e+00 : f32
    %152 = vector.broadcast %cst_58 : f32 to vector<8x192xf32>
    %153 = arith.addf %152, %151 : vector<8x192xf32>
    %154 = arith.divf %152, %153 : vector<8x192xf32>
    %155 = vector.extract_strided_slice %148 {offsets = [0, 192], sizes = [8, 64], strides = [1, 1]} : vector<8x256xf32> to vector<8x64xf32>
    %156 = math.tanh %155 : vector<8x64xf32>
    %157 = vector.extract_strided_slice %154 {offsets = [0, 64], sizes = [8, 64], strides = [1, 1]} : vector<8x192xf32> to vector<8x64xf32>
    %158 = arith.mulf %157, %129 : vector<8x64xf32>
    %159 = vector.extract_strided_slice %154 {offsets = [0, 0], sizes = [8, 64], strides = [1, 1]} : vector<8x192xf32> to vector<8x64xf32>
    %160 = arith.mulf %159, %156 : vector<8x64xf32>
    %161 = arith.addf %158, %160 : vector<8x64xf32>
    %162 = vector.extract_strided_slice %154 {offsets = [0, 128], sizes = [8, 64], strides = [1, 1]} : vector<8x192xf32> to vector<8x64xf32>
    %163 = math.tanh %161 : vector<8x64xf32>
    %164 = arith.mulf %162, %163 : vector<8x64xf32>
    %165 = vector.extract_strided_slice %164 {offsets = [0, 0], sizes = [8, 32], strides = [1, 1]} : vector<8x64xf32> to vector<8x32xf32>
    %166 = arith.index_cast %c4_i32 : i32 to index
    %c0_59 = arith.constant 0 : index
    %c0_60 = arith.constant 0 : index
    %167 = vector.load %arg11[%166, %c0_59, %c0_60] : memref<8x8x64xf32, #tpu.memory_space<vmem>>, vector<1x8x32xf32>
    %168 = vector.shape_cast %167 : vector<1x8x32xf32> to vector<8x32xf32>
    %169 = vector.shape_cast %165 : vector<8x32xf32> to vector<1x8x32xf32>
    tpu.vector_store %arg11[%166, %c0_59, %c0_60], %169 {strides = array<i32>} : memref<8x8x64xf32, #tpu.memory_space<vmem>>, vector<1x8x32xf32>,
    %170 = vector.extract_strided_slice %164 {offsets = [0, 32], sizes = [8, 32], strides = [1, 1]} : vector<8x64xf32> to vector<8x32xf32>
    %c7_i32_61 = arith.constant 7 : i32
    %171 = arith.subi %c7_i32_61, %c4_i32 : i32
    %172 = arith.index_cast %171 : i32 to index
    %c0_62 = arith.constant 0 : index
    %c32_63 = arith.constant 32 : index
    %173 = vector.load %arg11[%172, %c0_62, %c32_63] : memref<8x8x64xf32, #tpu.memory_space<vmem>>, vector<1x8x32xf32>
    %174 = vector.shape_cast %173 : vector<1x8x32xf32> to vector<8x32xf32>
    %175 = vector.shape_cast %170 : vector<8x32xf32> to vector<1x8x32xf32>
    tpu.vector_store %arg11[%172, %c0_62, %c32_63], %175 {strides = array<i32>} : memref<8x8x64xf32, #tpu.memory_space<vmem>>, vector<1x8x32xf32>,
    %c5_i32 = arith.constant 5 : i32
    %176 = arith.index_cast %c5_i32 : i32 to index
    %c0_64 = arith.constant 0 : index
    %c0_65 = arith.constant 0 : index
    %177 = vector.load %arg10[%176, %c0_64, %c0_65] : memref<8x8x256xf32, #tpu.memory_space<vmem>>, vector<1x8x256xf32>
    %178 = vector.shape_cast %177 : vector<1x8x256xf32> to vector<8x256xf32>
    %cst_66 = arith.constant dense<0.000000e+00> : vector<8x256xf32>
    %179 = tpu.matmul %164, %0, %cst_66 {dimension_numbers = #tpu.dot_dimension_numbers<[1], [0], [0], [1], [0, 0, 1, 1], [], []>} : vector<8x64xf32>, vector<64x256xf32>, vector<8x256xf32> -> vector<8x256xf32>
    %180 = arith.addf %178, %179 : vector<8x256xf32>
    %181 = vector.extract_strided_slice %180 {offsets = [0, 0], sizes = [8, 192], strides = [1, 1]} : vector<8x256xf32> to vector<8x192xf32>
    %182 = arith.negf %181 : vector<8x192xf32>
    %183 = math.exp %182 : vector<8x192xf32>
    %cst_67 = arith.constant 1.000000e+00 : f32
    %184 = vector.broadcast %cst_67 : f32 to vector<8x192xf32>
    %185 = arith.addf %184, %183 : vector<8x192xf32>
    %186 = arith.divf %184, %185 : vector<8x192xf32>
    %187 = vector.extract_strided_slice %180 {offsets = [0, 192], sizes = [8, 64], strides = [1, 1]} : vector<8x256xf32> to vector<8x64xf32>
    %188 = math.tanh %187 : vector<8x64xf32>
    %189 = vector.extract_strided_slice %186 {offsets = [0, 64], sizes = [8, 64], strides = [1, 1]} : vector<8x192xf32> to vector<8x64xf32>
    %190 = arith.mulf %189, %161 : vector<8x64xf32>
    %191 = vector.extract_strided_slice %186 {offsets = [0, 0], sizes = [8, 64], strides = [1, 1]} : vector<8x192xf32> to vector<8x64xf32>
    %192 = arith.mulf %191, %188 : vector<8x64xf32>
    %193 = arith.addf %190, %192 : vector<8x64xf32>
    %194 = vector.extract_strided_slice %186 {offsets = [0, 128], sizes = [8, 64], strides = [1, 1]} : vector<8x192xf32> to vector<8x64xf32>
    %195 = math.tanh %193 : vector<8x64xf32>
    %196 = arith.mulf %194, %195 : vector<8x64xf32>
    %197 = vector.extract_strided_slice %196 {offsets = [0, 0], sizes = [8, 32], strides = [1, 1]} : vector<8x64xf32> to vector<8x32xf32>
    %198 = arith.index_cast %c5_i32 : i32 to index
    %c0_68 = arith.constant 0 : index
    %c0_69 = arith.constant 0 : index
    %199 = vector.load %arg11[%198, %c0_68, %c0_69] : memref<8x8x64xf32, #tpu.memory_space<vmem>>, vector<1x8x32xf32>
    %200 = vector.shape_cast %199 : vector<1x8x32xf32> to vector<8x32xf32>
    %201 = vector.shape_cast %197 : vector<8x32xf32> to vector<1x8x32xf32>
    tpu.vector_store %arg11[%198, %c0_68, %c0_69], %201 {strides = array<i32>} : memref<8x8x64xf32, #tpu.memory_space<vmem>>, vector<1x8x32xf32>,
    %202 = vector.extract_strided_slice %196 {offsets = [0, 32], sizes = [8, 32], strides = [1, 1]} : vector<8x64xf32> to vector<8x32xf32>
    %c7_i32_70 = arith.constant 7 : i32
    %203 = arith.subi %c7_i32_70, %c5_i32 : i32
    %204 = arith.index_cast %203 : i32 to index
    %c0_71 = arith.constant 0 : index
    %c32_72 = arith.constant 32 : index
    %205 = vector.load %arg11[%204, %c0_71, %c32_72] : memref<8x8x64xf32, #tpu.memory_space<vmem>>, vector<1x8x32xf32>
    %206 = vector.shape_cast %205 : vector<1x8x32xf32> to vector<8x32xf32>
    %207 = vector.shape_cast %202 : vector<8x32xf32> to vector<1x8x32xf32>
    tpu.vector_store %arg11[%204, %c0_71, %c32_72], %207 {strides = array<i32>} : memref<8x8x64xf32, #tpu.memory_space<vmem>>, vector<1x8x32xf32>,
    %c6_i32 = arith.constant 6 : i32
    %208 = arith.index_cast %c6_i32 : i32 to index
    %c0_73 = arith.constant 0 : index
    %c0_74 = arith.constant 0 : index
    %209 = vector.load %arg10[%208, %c0_73, %c0_74] : memref<8x8x256xf32, #tpu.memory_space<vmem>>, vector<1x8x256xf32>
    %210 = vector.shape_cast %209 : vector<1x8x256xf32> to vector<8x256xf32>
    %cst_75 = arith.constant dense<0.000000e+00> : vector<8x256xf32>
    %211 = tpu.matmul %196, %0, %cst_75 {dimension_numbers = #tpu.dot_dimension_numbers<[1], [0], [0], [1], [0, 0, 1, 1], [], []>} : vector<8x64xf32>, vector<64x256xf32>, vector<8x256xf32> -> vector<8x256xf32>
    %212 = arith.addf %210, %211 : vector<8x256xf32>
    %213 = vector.extract_strided_slice %212 {offsets = [0, 0], sizes = [8, 192], strides = [1, 1]} : vector<8x256xf32> to vector<8x192xf32>
    %214 = arith.negf %213 : vector<8x192xf32>
    %215 = math.exp %214 : vector<8x192xf32>
    %cst_76 = arith.constant 1.000000e+00 : f32
    %216 = vector.broadcast %cst_76 : f32 to vector<8x192xf32>
    %217 = arith.addf %216, %215 : vector<8x192xf32>
    %218 = arith.divf %216, %217 : vector<8x192xf32>
    %219 = vector.extract_strided_slice %212 {offsets = [0, 192], sizes = [8, 64], strides = [1, 1]} : vector<8x256xf32> to vector<8x64xf32>
    %220 = math.tanh %219 : vector<8x64xf32>
    %221 = vector.extract_strided_slice %218 {offsets = [0, 64], sizes = [8, 64], strides = [1, 1]} : vector<8x192xf32> to vector<8x64xf32>
    %222 = arith.mulf %221, %193 : vector<8x64xf32>
    %223 = vector.extract_strided_slice %218 {offsets = [0, 0], sizes = [8, 64], strides = [1, 1]} : vector<8x192xf32> to vector<8x64xf32>
    %224 = arith.mulf %223, %220 : vector<8x64xf32>
    %225 = arith.addf %222, %224 : vector<8x64xf32>
    %226 = vector.extract_strided_slice %218 {offsets = [0, 128], sizes = [8, 64], strides = [1, 1]} : vector<8x192xf32> to vector<8x64xf32>
    %227 = math.tanh %225 : vector<8x64xf32>
    %228 = arith.mulf %226, %227 : vector<8x64xf32>
    %229 = vector.extract_strided_slice %228 {offsets = [0, 0], sizes = [8, 32], strides = [1, 1]} : vector<8x64xf32> to vector<8x32xf32>
    %230 = arith.index_cast %c6_i32 : i32 to index
    %c0_77 = arith.constant 0 : index
    %c0_78 = arith.constant 0 : index
    %231 = vector.load %arg11[%230, %c0_77, %c0_78] : memref<8x8x64xf32, #tpu.memory_space<vmem>>, vector<1x8x32xf32>
    %232 = vector.shape_cast %231 : vector<1x8x32xf32> to vector<8x32xf32>
    %233 = vector.shape_cast %229 : vector<8x32xf32> to vector<1x8x32xf32>
    tpu.vector_store %arg11[%230, %c0_77, %c0_78], %233 {strides = array<i32>} : memref<8x8x64xf32, #tpu.memory_space<vmem>>, vector<1x8x32xf32>,
    %234 = vector.extract_strided_slice %228 {offsets = [0, 32], sizes = [8, 32], strides = [1, 1]} : vector<8x64xf32> to vector<8x32xf32>
    %c7_i32_79 = arith.constant 7 : i32
    %235 = arith.subi %c7_i32_79, %c6_i32 : i32
    %236 = arith.index_cast %235 : i32 to index
    %c0_80 = arith.constant 0 : index
    %c32_81 = arith.constant 32 : index
    %237 = vector.load %arg11[%236, %c0_80, %c32_81] : memref<8x8x64xf32, #tpu.memory_space<vmem>>, vector<1x8x32xf32>
    %238 = vector.shape_cast %237 : vector<1x8x32xf32> to vector<8x32xf32>
    %239 = vector.shape_cast %234 : vector<8x32xf32> to vector<1x8x32xf32>
    tpu.vector_store %arg11[%236, %c0_80, %c32_81], %239 {strides = array<i32>} : memref<8x8x64xf32, #tpu.memory_space<vmem>>, vector<1x8x32xf32>,
    %c7_i32_82 = arith.constant 7 : i32
    %240 = arith.index_cast %c7_i32_82 : i32 to index
    %c0_83 = arith.constant 0 : index
    %c0_84 = arith.constant 0 : index
    %241 = vector.load %arg10[%240, %c0_83, %c0_84] : memref<8x8x256xf32, #tpu.memory_space<vmem>>, vector<1x8x256xf32>
    %242 = vector.shape_cast %241 : vector<1x8x256xf32> to vector<8x256xf32>
    %cst_85 = arith.constant dense<0.000000e+00> : vector<8x256xf32>
    %243 = tpu.matmul %228, %0, %cst_85 {dimension_numbers = #tpu.dot_dimension_numbers<[1], [0], [0], [1], [0, 0, 1, 1], [], []>} : vector<8x64xf32>, vector<64x256xf32>, vector<8x256xf32> -> vector<8x256xf32>
    %244 = arith.addf %242, %243 : vector<8x256xf32>
    %245 = vector.extract_strided_slice %244 {offsets = [0, 0], sizes = [8, 192], strides = [1, 1]} : vector<8x256xf32> to vector<8x192xf32>
    %246 = arith.negf %245 : vector<8x192xf32>
    %247 = math.exp %246 : vector<8x192xf32>
    %cst_86 = arith.constant 1.000000e+00 : f32
    %248 = vector.broadcast %cst_86 : f32 to vector<8x192xf32>
    %249 = arith.addf %248, %247 : vector<8x192xf32>
    %250 = arith.divf %248, %249 : vector<8x192xf32>
    %251 = vector.extract_strided_slice %244 {offsets = [0, 192], sizes = [8, 64], strides = [1, 1]} : vector<8x256xf32> to vector<8x64xf32>
    %252 = math.tanh %251 : vector<8x64xf32>
    %253 = vector.extract_strided_slice %250 {offsets = [0, 64], sizes = [8, 64], strides = [1, 1]} : vector<8x192xf32> to vector<8x64xf32>
    %254 = arith.mulf %253, %225 : vector<8x64xf32>
    %255 = vector.extract_strided_slice %250 {offsets = [0, 0], sizes = [8, 64], strides = [1, 1]} : vector<8x192xf32> to vector<8x64xf32>
    %256 = arith.mulf %255, %252 : vector<8x64xf32>
    %257 = arith.addf %254, %256 : vector<8x64xf32>
    %258 = vector.extract_strided_slice %250 {offsets = [0, 128], sizes = [8, 64], strides = [1, 1]} : vector<8x192xf32> to vector<8x64xf32>
    %259 = math.tanh %257 : vector<8x64xf32>
    %260 = arith.mulf %258, %259 : vector<8x64xf32>
    %261 = vector.extract_strided_slice %260 {offsets = [0, 0], sizes = [8, 32], strides = [1, 1]} : vector<8x64xf32> to vector<8x32xf32>
    %262 = arith.index_cast %c7_i32_82 : i32 to index
    %c0_87 = arith.constant 0 : index
    %c0_88 = arith.constant 0 : index
    %263 = vector.load %arg11[%262, %c0_87, %c0_88] : memref<8x8x64xf32, #tpu.memory_space<vmem>>, vector<1x8x32xf32>
    %264 = vector.shape_cast %263 : vector<1x8x32xf32> to vector<8x32xf32>
    %265 = vector.shape_cast %261 : vector<8x32xf32> to vector<1x8x32xf32>
    tpu.vector_store %arg11[%262, %c0_87, %c0_88], %265 {strides = array<i32>} : memref<8x8x64xf32, #tpu.memory_space<vmem>>, vector<1x8x32xf32>,
    %266 = vector.extract_strided_slice %260 {offsets = [0, 32], sizes = [8, 32], strides = [1, 1]} : vector<8x64xf32> to vector<8x32xf32>
    %c7_i32_89 = arith.constant 7 : i32
    %267 = arith.subi %c7_i32_89, %c7_i32_82 : i32
    %268 = arith.index_cast %267 : i32 to index
    %c0_90 = arith.constant 0 : index
    %c32_91 = arith.constant 32 : index
    %269 = vector.load %arg11[%268, %c0_90, %c32_91] : memref<8x8x64xf32, #tpu.memory_space<vmem>>, vector<1x8x32xf32>
    %270 = vector.shape_cast %269 : vector<1x8x32xf32> to vector<8x32xf32>
    %271 = vector.shape_cast %266 : vector<8x32xf32> to vector<1x8x32xf32>
    tpu.vector_store %arg11[%268, %c0_90, %c32_91], %271 {strides = array<i32>} : memref<8x8x64xf32, #tpu.memory_space<vmem>>, vector<1x8x32xf32>,
    %c8_i32 = arith.constant 8 : i32
    %c0_92 = arith.constant 0 : index
    %c0_93 = arith.constant 0 : index
    %c0_94 = arith.constant 0 : index
    %272 = vector.load %arg11[%c0_92, %c0_93, %c0_94] : memref<8x8x64xf32, #tpu.memory_space<vmem>>, vector<8x8x64xf32>
    %273 = vector.shape_cast %272 : vector<8x8x64xf32> to vector<64x64xf32>
    %cst_95 = arith.constant dense<0.000000e+00> : vector<64x16xf32>
    %274 = tpu.matmul %273, %1, %cst_95 {dimension_numbers = #tpu.dot_dimension_numbers<[1], [0], [0], [1], [0, 0, 1, 1], [], []>} : vector<64x64xf32>, vector<64x16xf32>, vector<64x16xf32> -> vector<64x16xf32>
    %275 = vector.broadcast %2 : vector<1x16xf32> to vector<64x16xf32>
    %276 = arith.addf %274, %275 : vector<64x16xf32>
    %cst_96 = arith.constant 0.000000e+00 : f32
    %277 = vector.broadcast %cst_96 : f32 to vector<64x16xf32>
    %278 = arith.cmpf ogt, %276, %277 : vector<64x16xf32>
    %cst_97 = arith.constant 0.000000e+00 : f32
    %279 = vector.broadcast %cst_97 : f32 to vector<64x16xf32>
    %280 = arith.minimumf %276, %279 : vector<64x16xf32>
    %281 = math.exp %280 : vector<64x16xf32>
    %cst_98 = arith.constant 1.000000e+00 : f32
    %282 = vector.broadcast %cst_98 : f32 to vector<64x16xf32>
    %283 = arith.subf %281, %282 : vector<64x16xf32>
    %284 = arith.select %278, %276, %283 : vector<64x16xi1>, vector<64x16xf32>
    %cst_99 = arith.constant dense<0.000000e+00> : vector<64x9xf32>
    %285 = tpu.matmul %284, %3, %cst_99 {dimension_numbers = #tpu.dot_dimension_numbers<[1], [0], [0], [1], [0, 0, 1, 1], [], []>} : vector<64x16xf32>, vector<16x9xf32>, vector<64x9xf32> -> vector<64x9xf32>
    %286 = vector.broadcast %4 : vector<1x9xf32> to vector<64x9xf32>
    %287 = arith.addf %285, %286 : vector<64x9xf32>
    %c0_100 = arith.constant 0 : index
    %c0_101 = arith.constant 0 : index
    %288 = vector.load %arg9[%c0_100, %c0_101] : memref<64x9xf32, #tpu.memory_space<vmem>>, vector<64x9xf32>
    tpu.vector_store %arg9[%c0_100, %c0_101], %287 {strides = array<i32>} : memref<64x9xf32, #tpu.memory_space<vmem>>, vector<64x9xf32>,
    return
  }
  func.func @transform_0(%arg0: i32) -> (i32, i32, i32) {
    %c0_i32 = arith.constant 0 : i32
    %c0_i32_0 = arith.constant 0 : i32
    %c0_i32_1 = arith.constant 0 : i32
    %c0_i32_2 = arith.constant 0 : i32
    return %c0_i32, %c0_i32_0, %c0_i32_1 : i32, i32, i32
  }
  func.func @transform_1(%arg0: i32) -> (i32, i32) {
    %c0_i32 = arith.constant 0 : i32
    %c0_i32_0 = arith.constant 0 : i32
    %c0_i32_1 = arith.constant 0 : i32
    return %c0_i32, %c0_i32_0 : i32, i32
  }
  func.func @transform_2(%arg0: i32) -> (i32, i32) {
    %c0_i32 = arith.constant 0 : i32
    %c0_i32_0 = arith.constant 0 : i32
    %c0_i32_1 = arith.constant 0 : i32
    return %c0_i32, %c0_i32_0 : i32, i32
  }
  func.func @transform_3(%arg0: i32) -> (i32, i32) {
    %c0_i32 = arith.constant 0 : i32
    %c0_i32_0 = arith.constant 0 : i32
    %c0_i32_1 = arith.constant 0 : i32
    return %c0_i32, %c0_i32_0 : i32, i32
  }
  func.func @transform_4(%arg0: i32) -> (i32, i32) {
    %c0_i32 = arith.constant 0 : i32
    %c0_i32_0 = arith.constant 0 : i32
    %c0_i32_1 = arith.constant 0 : i32
    return %c0_i32, %c0_i32_0 : i32, i32
  }
  func.func @transform_5(%arg0: i32) -> (i32, i32) {
    %c0_i32 = arith.constant 0 : i32
    %c0_i32_0 = arith.constant 0 : i32
    %c0_i32_1 = arith.constant 0 : i32
    return %c0_i32, %c0_i32_0 : i32, i32
  }
  func.func @transform_6(%arg0: i32) -> (i32, i32) {
    %c0_i32 = arith.constant 0 : i32
    %c0_i32_0 = arith.constant 0 : i32
    %c0_i32_1 = arith.constant 0 : i32
    return %c0_i32, %c0_i32_0 : i32, i32
  }
  func.func @transform_7(%arg0: i32) -> (i32, i32) {
    %c0_i32 = arith.constant 0 : i32
    %c0_i32_0 = arith.constant 0 : i32
    %c0_i32_1 = arith.constant 0 : i32
    return %c0_i32, %c0_i32_0 : i32, i32
  }
  func.func @transform_8(%arg0: i32) -> (i32, i32) {
    %c0_i32 = arith.constant 0 : i32
    %c0_i32_0 = arith.constant 0 : i32
    %c0_i32_1 = arith.constant 0 : i32
    return %c0_i32, %c0_i32_0 : i32, i32
  }
}

</mosaic_0001>

<llo_original>
// kernel: forward.1
$region0: #{forward.1}
  #allocation0 [shape = 'u32[]', space=smem, size = 0x4, offset = 0x4, fixed_abs, tag = 'smem constant byte address 0x4 - core index']
  #allocation1 [shape = 'u32[144,128]{1,0:T(1,128)}', space=vmem, size = 0x12000, scoped, tag = 'internal scratch']
  #allocation2 [shape = 'f32[8,8,256]{2,1,0:T(8,128)}', space=vmem, size = 0x10000, scoped, tag = 'scratch operand']
  #allocation3 [shape = 'f32[8,8,64]{2,1,0:T(8,128)}', space=vmem, size = 0x8000, scoped, tag = 'scratch operand']
  %s0 = inlined_call_operand.vmem [shape: f32[8,8,64], index: 0, kind: input, shape index: {}]
  %s1 = inlined_call_operand.vmem [shape: f32[64,256], index: 1, kind: input, shape index: {}]
  %s2 = inlined_call_operand.vmem [shape: f32[1,256], index: 2, kind: input, shape index: {}]
  %s3 = inlined_call_operand.vmem [shape: f32[64,256], index: 3, kind: input, shape index: {}]
  %s4 = inlined_call_operand.vmem [shape: f32[64,16], index: 4, kind: input, shape index: {}]
  %s5 = inlined_call_operand.vmem [shape: f32[1,16], index: 5, kind: input, shape index: {}]
  %s6 = inlined_call_operand.vmem [shape: f32[16,9], index: 6, kind: input, shape index: {}]
  %s7 = inlined_call_operand.vmem [shape: f32[1,9], index: 7, kind: input, shape index: {}]
  %s8 = inlined_call_operand.vmem [shape: f32[64,9], index: 8, kind: output, shape index: {}]
  %s9 = sld [smem:[#allocation0]]
  $region42: #{forward.1} parent=0
    _
  %s11 = ssub.s32 1, %s9
  %s12 = scalar_select 0, %s11, %s9
  // Predicated region
  $region2: #{forward.1} parent=0 // pred_check
    _
  $region3: #{forward.1} parent=0 // pred_check_branch
    %14 = sbr.rel (0) target = $region5
  $region4: #{forward.1} parent=0 // pred_region
    _
  $region5: #{forward.1} parent=0 // pred_fallthru
    _
  // Predicated region
  $region6: #{forward.1} parent=0 // pred_check
    _
  $region7: #{forward.1} parent=0 // pred_check_branch
    %16 = sbr.rel (0) target = $region9
  $region8: #{forward.1} parent=0 // pred_region
    _
  $region9: #{forward.1} parent=0 // pred_fallthru
    _
  // Predicated region
  $region10: #{forward.1} parent=0 // pred_check
    _
  $region11: #{forward.1} parent=0 // pred_check_branch
    %18 = sbr.rel (0) target = $region13
  $region12: #{forward.1} parent=0 // pred_region
    _
  $region13: #{forward.1} parent=0 // pred_fallthru
    _
  // Predicated region
  $region14: #{forward.1} parent=0 // pred_check
    _
  $region15: #{forward.1} parent=0 // pred_check_branch
    %20 = sbr.rel (0) target = $region17
  $region16: #{forward.1} parent=0 // pred_region
    _
  $region17: #{forward.1} parent=0 // pred_fallthru
    _
  // Predicated region
  $region18: #{forward.1} parent=0 // pred_check
    _
  $region19: #{forward.1} parent=0 // pred_check_branch
    %22 = sbr.rel (0) target = $region21
  $region20: #{forward.1} parent=0 // pred_region
    _
  $region21: #{forward.1} parent=0 // pred_fallthru
    _
  // Predicated region
  $region22: #{forward.1} parent=0 // pred_check
    _
  $region23: #{forward.1} parent=0 // pred_check_branch
    %24 = sbr.rel (0) target = $region25
  $region24: #{forward.1} parent=0 // pred_region
    _
  $region25: #{forward.1} parent=0 // pred_fallthru
    _
  // Predicated region
  $region26: #{forward.1} parent=0 // pred_check
    _
  $region27: #{forward.1} parent=0 // pred_check_branch
    %26 = sbr.rel (0) target = $region29
  $region28: #{forward.1} parent=0 // pred_region
    _
  $region29: #{forward.1} parent=0 // pred_fallthru
    _
  // Predicated region
  $region30: #{forward.1} parent=0 // pred_check
    _
  $region31: #{forward.1} parent=0 // pred_check_branch
    %28 = sbr.rel (0) target = $region33
  $region32: #{forward.1} parent=0 // pred_region
    _
  $region33: #{forward.1} parent=0 // pred_fallthru
    _
  %v29 = vld [vmem:[%s3] sm:$0xff]
  %v30 = vld [vmem:[%s3 + $0x8] sm:$0xff]
  %v31 = vld [vmem:[%s3 + $0x10] sm:$0xff]
  %v32 = vld [vmem:[%s3 + $0x18] sm:$0xff]
  %v33 = vld [vmem:[%s3 + $0x20] sm:$0xff]
  %v34 = vld [vmem:[%s3 + $0x28] sm:$0xff]
  %v35 = vld [vmem:[%s3 + $0x30] sm:$0xff]
  %v36 = vld [vmem:[%s3 + $0x38] sm:$0xff]
  %v37 = vld [vmem:[%s3 + $0x40] sm:$0xff]
  %v38 = vld [vmem:[%s3 + $0x48] sm:$0xff]
  %v39 = vld [vmem:[%s3 + $0x50] sm:$0xff]
  %v40 = vld [vmem:[%s3 + $0x58] sm:$0xff]
  %v41 = vld [vmem:[%s3 + $0x60] sm:$0xff]
  %v42 = vld [vmem:[%s3 + $0x68] sm:$0xff]
  %v43 = vld [vmem:[%s3 + $0x70] sm:$0xff]
  %v44 = vld [vmem:[%s3 + $0x78] sm:$0xff]
  %v45 = vld [vmem:[%s4] sm:$0xff]
  %v46 = vld [vmem:[%s4 + $0x8] sm:$0xff]
  %v47 = vld [vmem:[%s4 + $0x10] sm:$0xff]
  %v48 = vld [vmem:[%s4 + $0x18] sm:$0xff]
  %v49 = vld [vmem:[%s4 + $0x20] sm:$0xff]
  %v50 = vld [vmem:[%s4 + $0x28] sm:$0xff]
  %v51 = vld [vmem:[%s4 + $0x30] sm:$0xff]
  %v52 = vld [vmem:[%s4 + $0x38] sm:$0xff]
  %v53 = vld [vmem:[%s5] sm:$0x1]
  %v54 = vld [vmem:[%s6] sm:$0xff]
  %v55 = vld [vmem:[%s6 + $0x8] sm:$0xff]
  %v56 = vld [vmem:[%s7] sm:$0x1]
  %v57 = vld [vmem:[%s0] sm:$0xff]
  %v58 = vld [vmem:[%s0 + $0x8] sm:$0xff]
  %v59 = vld [vmem:[%s0 + $0x10] sm:$0xff]
  %v60 = vld [vmem:[%s0 + $0x18] sm:$0xff]
  %v61 = vld [vmem:[%s0 + $0x20] sm:$0xff]
  %v62 = vld [vmem:[%s0 + $0x28] sm:$0xff]
  %v63 = vld [vmem:[%s0 + $0x30] sm:$0xff]
  %v64 = vld [vmem:[%s0 + $0x38] sm:$0xff]
  %v65 = vld [vmem:[%s1] sm:$0xff]
  %v66 = vld [vmem:[%s1 + $0x8] sm:$0xff]
  %v67 = vld [vmem:[%s1 + $0x10] sm:$0xff]
  %v68 = vld [vmem:[%s1 + $0x18] sm:$0xff]
  %v69 = vld [vmem:[%s1 + $0x20] sm:$0xff]
  %v70 = vld [vmem:[%s1 + $0x28] sm:$0xff]
  %v71 = vld [vmem:[%s1 + $0x30] sm:$0xff]
  %v72 = vld [vmem:[%s1 + $0x38] sm:$0xff]
  %v73 = vld [vmem:[%s1 + $0x40] sm:$0xff]
  %v74 = vld [vmem:[%s1 + $0x48] sm:$0xff]
  %v75 = vld [vmem:[%s1 + $0x50] sm:$0xff]
  %v76 = vld [vmem:[%s1 + $0x58] sm:$0xff]
  %v77 = vld [vmem:[%s1 + $0x60] sm:$0xff]
  %v78 = vld [vmem:[%s1 + $0x68] sm:$0xff]
  %v79 = vld [vmem:[%s1 + $0x70] sm:$0xff]
  %v80 = vld [vmem:[%s1 + $0x78] sm:$0xff]
  %v81 = vld [vmem:[%s2] sm:$0x3]
  %v83 = vlaneseq
  %v84 = vshrl.u32 %v83, 7
  %v85 = vsub.s32 0, %v84
  %v86 = vrot.slane %v81, %v85
  %v87 = vlaneseq
  %v88 = vshrl.u32 %v87, 7
  %v89 = vsub.s32 1, %v88
  %v90 = vrot.slane %v81, %v89
  %vm93 = vcmask 523264
  %v95 = vsel %vm93, %v57, 0
  %v98 = vsel %vm93, %v58, 0
  %v101 = vsel %vm93, %v59, 0
  %v104 = vsel %vm93, %v60, 0
  %v107 = vsel %vm93, %v61, 0
  %v110 = vsel %vm93, %v62, 0
  %v113 = vsel %vm93, %v63, 0
  %v116 = vsel %vm93, %v64, 0
  %118 = vmatprep.subr.mxu0 %v66
  %119 = vmatpush1.msra.mxu0 %v65
  %120 = vmatprep.subr.mxu0 %v68
  %121 = vmatpush1.msra.mxu0 %v67
  %122 = vmatprep.subr.mxu0 %v70
  %123 = vmatpush1.msra.mxu0 %v69
  %124 = vmatprep.subr.mxu0 %v72
  %125 = vmatpush1.msra.mxu0 %v71
  %126 = vmatprep.subr.mxu0 %v74
  %127 = vmatpush1.msra.mxu0 %v73
  %128 = vmatprep.subr.mxu0 %v76
  %129 = vmatpush1.msra.mxu0 %v75
  %130 = vmatprep.subr.mxu0 %v78
  %131 = vmatpush1.msra.mxu0 %v77
  %132 = vmatprep.subr.mxu0 %v80
  %133 = vmatpush1.msra.mxu0 %v79
  %134 = vmatprep.subr.mxu0 0.0
  %135 = vmatpush1.msra.mxu0 0.0
  %136 = vmatprep.subr.mxu0 0.0
  %137 = vmatpush1.msra.mxu0 0.0
  %138 = vmatprep.subr.mxu0 0.0
  %139 = vmatpush1.msra.mxu0 0.0
  %140 = vmatprep.subr.mxu0 0.0
  %141 = vmatpush1.msra.mxu0 0.0
  %142 = vmatprep.subr.mxu0 0.0
  %143 = vmatpush1.msra.mxu0 0.0
  %144 = vmatprep.subr.mxu0 0.0
  %145 = vmatpush1.msra.mxu0 0.0
  %146 = vmatprep.subr.mxu0 0.0
  %147 = vmatpush1.msra.mxu0 0.0
  %148 = vmatprep.subr.mxu0 0.0
  %149 = vmatpush1.msra.mxu0 0.0
  %150 = vmatprep.subr.mxu0 0.0
  %151 = vmatpush1.msra.mxu0 0.0
  %152 = vmatprep.subr.mxu0 0.0
  %153 = vmatpush1.msra.mxu0 0.0
  %154 = vmatprep.subr.mxu0 0.0
  %155 = vmatpush1.msra.mxu0 0.0
  %156 = vmatprep.subr.mxu0 0.0
  %157 = vmatpush1.msra.mxu0 0.0
  %158 = vmatprep.subr.mxu0 0.0
  %159 = vmatpush1.msra.mxu0 0.0
  %160 = vmatprep.subr.mxu0 0.0
  %161 = vmatpush1.msra.mxu0 0.0
  %162 = vmatprep.subr.mxu0 0.0
  %163 = vmatpush1.msra.mxu0 0.0
  %164 = vmatprep.subr.mxu0 0.0
  %165 = vmatpush1.msra.mxu0 0.0
  %166 = vmatprep.subr.mxu0 0.0
  %167 = vmatpush1.msra.mxu0 0.0
  %168 = vmatprep.subr.mxu0 0.0
  %169 = vmatpush1.msra.mxu0 0.0
  %170 = vmatprep.subr.mxu0 0.0
  %171 = vmatpush1.msra.mxu0 0.0
  %172 = vmatprep.subr.mxu0 0.0
  %173 = vmatpush1.msra.mxu0 0.0
  %174 = vmatprep.subr.mxu0 0.0
  %175 = vmatpush1.msra.mxu0 0.0
  %176 = vmatprep.subr.mxu0 0.0
  %177 = vmatpush1.msra.mxu0 0.0
  %178 = vmatprep.subr.mxu0 0.0
  %179 = vmatpush1.msra.mxu0 0.0
  %180 = vmatprep.subr.mxu0 0.0
  %181 = vmatpush1.msra.mxu0 0.0
  %182 = vmatprep.mubr.f32.mxu0 0.0
  %183 = vmatmul.mubr.f32.gmra.mrb[0].mxu0 %v95
  %v184 = vpop.f32.mrb[0].mxu0
  %v185 = vadd.f32 %v86, %v184
  %v186 = vpop.f32.mrb[0].mxu0
  %v187 = vadd.f32 %v90, %v186
  %188 = vmatprep.mubr.f32.mxu0 0.0
  %189 = vmatmul.mubr.f32.gmra.mrb[0].mxu0 %v98
  %v190 = vpop.f32.mrb[0].mxu0
  %v191 = vadd.f32 %v86, %v190
  %v192 = vpop.f32.mrb[0].mxu0
  %v193 = vadd.f32 %v90, %v192
  %194 = vmatprep.mubr.f32.mxu0 0.0
  %195 = vmatmul.mubr.f32.gmra.mrb[0].mxu0 %v101
  %v196 = vpop.f32.mrb[0].mxu0
  %v197 = vadd.f32 %v86, %v196
  %v198 = vpop.f32.mrb[0].mxu0
  %v199 = vadd.f32 %v90, %v198
  %200 = vmatprep.mubr.f32.mxu0 0.0
  %201 = vmatmul.mubr.f32.gmra.mrb[0].mxu0 %v104
  %v202 = vpop.f32.mrb[0].mxu0
  %v203 = vadd.f32 %v86, %v202
  %v204 = vpop.f32.mrb[0].mxu0
  %v205 = vadd.f32 %v90, %v204
  %206 = vmatprep.mubr.f32.mxu0 0.0
  %207 = vmatmul.mubr.f32.gmra.mrb[0].mxu0 %v107
  %v208 = vpop.f32.mrb[0].mxu0
  %v209 = vadd.f32 %v86, %v208
  %v210 = vpop.f32.mrb[0].mxu0
  %v211 = vadd.f32 %v90, %v210
  %212 = vmatprep.mubr.f32.mxu0 0.0
  %213 = vmatmul.mubr.f32.gmra.mrb[0].mxu0 %v110
  %v214 = vpop.f32.mrb[0].mxu0
  %v215 = vadd.f32 %v86, %v214
  %v216 = vpop.f32.mrb[0].mxu0
  %v217 = vadd.f32 %v90, %v216
  %218 = vmatprep.mubr.f32.mxu0 0.0
  %219 = vmatmul.mubr.f32.gmra.mrb[0].mxu0 %v113
  %v220 = vpop.f32.mrb[0].mxu0
  %v221 = vadd.f32 %v86, %v220
  %v222 = vpop.f32.mrb[0].mxu0
  %v223 = vadd.f32 %v90, %v222
  %224 = vmatprep.mubr.f32.mxu0 0.0
  %225 = vmatmul.mubr.f32.gmra.mrb[0].mxu0 %v116
  %v226 = vpop.f32.mrb[0].mxu0
  %v227 = vadd.f32 %v86, %v226
  %v228 = vpop.f32.mrb[0].mxu0
  %v229 = vadd.f32 %v90, %v228
  %230 = vdwg.mxu0
  %231 = vst [vmem:[#allocation2] sm:$0xff] %v185
  %232 = vst [vmem:[#allocation2 + $0x8] sm:$0xff] %v187
  %233 = vst [vmem:[#allocation2 + $0x10] sm:$0xff] %v191
  %234 = vst [vmem:[#allocation2 + $0x18] sm:$0xff] %v193
  %235 = vst [vmem:[#allocation2 + $0x20] sm:$0xff] %v197
  %236 = vst [vmem:[#allocation2 + $0x28] sm:$0xff] %v199
  %237 = vst [vmem:[#allocation2 + $0x30] sm:$0xff] %v203
  %238 = vst [vmem:[#allocation2 + $0x38] sm:$0xff] %v205
  %239 = vst [vmem:[#allocation2 + $0x40] sm:$0xff] %v209
  %240 = vst [vmem:[#allocation2 + $0x48] sm:$0xff] %v211
  %241 = vst [vmem:[#allocation2 + $0x50] sm:$0xff] %v215
  %242 = vst [vmem:[#allocation2 + $0x58] sm:$0xff] %v217
  %243 = vst [vmem:[#allocation2 + $0x60] sm:$0xff] %v221
  %244 = vst [vmem:[#allocation2 + $0x68] sm:$0xff] %v223
  %245 = vst [vmem:[#allocation2 + $0x70] sm:$0xff] %v227
  %246 = vst [vmem:[#allocation2 + $0x78] sm:$0xff] %v229
  %v247 = vld [vmem:[#allocation2] sm:$0xff]
  %v248 = vld [vmem:[#allocation2 + $0x8] sm:$0xff]
  %v250 = vsel %vm93, 0.0, 0
  %252 = vmatprep.subr.mxu0 %v30
  %253 = vmatpush1.msra.mxu0 %v29
  %254 = vmatprep.subr.mxu0 %v32
  %255 = vmatpush1.msra.mxu0 %v31
  %256 = vmatprep.subr.mxu0 %v34
  %257 = vmatpush1.msra.mxu0 %v33
  %258 = vmatprep.subr.mxu0 %v36
  %259 = vmatpush1.msra.mxu0 %v35
  %260 = vmatprep.subr.mxu0 %v38
  %261 = vmatpush1.msra.mxu0 %v37
  %262 = vmatprep.subr.mxu0 %v40
  %263 = vmatpush1.msra.mxu0 %v39
  %264 = vmatprep.subr.mxu0 %v42
  %265 = vmatpush1.msra.mxu0 %v41
  %266 = vmatprep.subr.mxu0 %v44
  %267 = vmatpush1.msra.mxu0 %v43
  %268 = vmatprep.subr.mxu0 0.0
  %269 = vmatpush1.msra.mxu0 0.0
  %270 = vmatprep.subr.mxu0 0.0
  %271 = vmatpush1.msra.mxu0 0.0
  %272 = vmatprep.subr.mxu0 0.0
  %273 = vmatpush1.msra.mxu0 0.0
  %274 = vmatprep.subr.mxu0 0.0
  %275 = vmatpush1.msra.mxu0 0.0
  %276 = vmatprep.subr.mxu0 0.0
  %277 = vmatpush1.msra.mxu0 0.0
  %278 = vmatprep.subr.mxu0 0.0
  %279 = vmatpush1.msra.mxu0 0.0
  %280 = vmatprep.subr.mxu0 0.0
  %281 = vmatpush1.msra.mxu0 0.0
  %282 = vmatprep.subr.mxu0 0.0
  %283 = vmatpush1.msra.mxu0 0.0
  %284 = vmatprep.subr.mxu0 0.0
  %285 = vmatpush1.msra.mxu0 0.0
  %286 = vmatprep.subr.mxu0 0.0
  %287 = vmatpush1.msra.mxu0 0.0
  %288 = vmatprep.subr.mxu0 0.0
  %289 = vmatpush1.msra.mxu0 0.0
  %290 = vmatprep.subr.mxu0 0.0
  %291 = vmatpush1.msra.mxu0 0.0
  %292 = vmatprep.subr.mxu0 0.0
  %293 = vmatpush1.msra.mxu0 0.0
  %294 = vmatprep.subr.mxu0 0.0
  %295 = vmatpush1.msra.mxu0 0.0
  %296 = vmatprep.subr.mxu0 0.0
  %297 = vmatpush1.msra.mxu0 0.0
  %298 = vmatprep.subr.mxu0 0.0
  %299 = vmatpush1.msra.mxu0 0.0
  %300 = vmatprep.subr.mxu0 0.0
  %301 = vmatpush1.msra.mxu0 0.0
  %302 = vmatprep.subr.mxu0 0.0
  %303 = vmatpush1.msra.mxu0 0.0
  %304 = vmatprep.subr.mxu0 0.0
  %305 = vmatpush1.msra.mxu0 0.0
  %306 = vmatprep.subr.mxu0 0.0
  %307 = vmatpush1.msra.mxu0 0.0
  %308 = vmatprep.subr.mxu0 0.0
  %309 = vmatpush1.msra.mxu0 0.0
  %310 = vmatprep.subr.mxu0 0.0
  %311 = vmatpush1.msra.mxu0 0.0
  %312 = vmatprep.subr.mxu0 0.0
  %313 = vmatpush1.msra.mxu0 0.0
  %314 = vmatprep.subr.mxu0 0.0
  %315 = vmatpush1.msra.mxu0 0.0
  %316 = vmatprep.mubr.f32.mxu0 0.0
  %317 = vmatmul.mubr.f32.gmra.mrb[0].mxu0 %v250
  %v318 = vpop.f32.mrb[0].mxu0
  %v319 = vadd.f32 0.0, %v318
  %v320 = vpop.f32.mrb[0].mxu0
  %v321 = vadd.f32 0.0, %v320
  %322 = vdwg.mxu0
  %v323 = vadd.f32 %v247, %v319
  %v324 = vadd.f32 %v248, %v321
  %v325 = vxor.u32 %v323, 2147483648
  %v326 = vxor.u32 %v324, 2147483648
  %v327 = vmul.f32 %v325, 1.442695
  %v328 = vpow.pop %v327
  %v329 = vmul.f32 %v326, 1.442695
  %v330 = vpow.pop %v329
  %v331 = vadd.f32 %v328, 1.0
  %v332 = vadd.f32 %v330, 1.0
  %v333 = vrcp.pop %v331
  %v334 = vmul.f32 1.0, %v333
  %v335 = vrcp.pop %v332
  %v336 = vmul.f32 1.0, %v335
  %v337 = vtanh.pop %v324
  %v338 = vmul.f32 %v334, 0.0
  %340 = vrot.lane.b32.xlu0 %v337, 64
  %v341 = vpop.permute.xlu0 %340
  %v343 = vmul.f32 %v334, %v341
  %345 = vrot.lane.b32.xlu0 %v343, 64
  %v346 = vpop.permute.xlu0 %345
  %v348 = vadd.f32 %v338, %v346
  %v349 = vtanh.pop %v348
  %351 = vrot.lane.b32.xlu0 %v349, 64
  %v352 = vpop.permute.xlu0 %351
  %v354 = vmul.f32 %v336, %v352
  %vm355 = vcmask 261120
  %356 = vst.msk [vmem:[#allocation3] sm:$0xff] %vm355, %v354
  %s357 = scalar_lea.vmem [#allocation3], 56
  %vm358 = vcmask 523520
  %359 = vst.msk [vmem:[%s357] sm:$0xff] %vm358, %v354
  %s360 = scalar_lea.vmem [#allocation2], 16
  %v361 = vld [vmem:[%s360] sm:$0xff]
  %v362 = vld [vmem:[%s360 + $0x8] sm:$0xff]
  %v364 = vsel %vm93, %v354, 0
  %366 = vmatprep.subr.mxu0 %v30
  %367 = vmatpush1.msra.mxu0 %v29
  %368 = vmatprep.subr.mxu0 %v32
  %369 = vmatpush1.msra.mxu0 %v31
  %370 = vmatprep.subr.mxu0 %v34
  %371 = vmatpush1.msra.mxu0 %v33
  %372 = vmatprep.subr.mxu0 %v36
  %373 = vmatpush1.msra.mxu0 %v35
  %374 = vmatprep.subr.mxu0 %v38
  %375 = vmatpush1.msra.mxu0 %v37
  %376 = vmatprep.subr.mxu0 %v40
  %377 = vmatpush1.msra.mxu0 %v39
  %378 = vmatprep.subr.mxu0 %v42
  %379 = vmatpush1.msra.mxu0 %v41
  %380 = vmatprep.subr.mxu0 %v44
  %381 = vmatpush1.msra.mxu0 %v43
  %382 = vmatprep.subr.mxu0 0.0
  %383 = vmatpush1.msra.mxu0 0.0
  %384 = vmatprep.subr.mxu0 0.0
  %385 = vmatpush1.msra.mxu0 0.0
  %386 = vmatprep.subr.mxu0 0.0
  %387 = vmatpush1.msra.mxu0 0.0
  %388 = vmatprep.subr.mxu0 0.0
  %389 = vmatpush1.msra.mxu0 0.0
  %390 = vmatprep.subr.mxu0 0.0
  %391 = vmatpush1.msra.mxu0 0.0
  %392 = vmatprep.subr.mxu0 0.0
  %393 = vmatpush1.msra.mxu0 0.0
  %394 = vmatprep.subr.mxu0 0.0
  %395 = vmatpush1.msra.mxu0 0.0
  %396 = vmatprep.subr.mxu0 0.0
  %397 = vmatpush1.msra.mxu0 0.0
  %398 = vmatprep.subr.mxu0 0.0
  %399 = vmatpush1.msra.mxu0 0.0
  %400 = vmatprep.subr.mxu0 0.0
  %401 = vmatpush1.msra.mxu0 0.0
  %402 = vmatprep.subr.mxu0 0.0
  %403 = vmatpush1.msra.mxu0 0.0
  %404 = vmatprep.subr.mxu0 0.0
  %405 = vmatpush1.msra.mxu0 0.0
  %406 = vmatprep.subr.mxu0 0.0
  %407 = vmatpush1.msra.mxu0 0.0
  %408 = vmatprep.subr.mxu0 0.0
  %409 = vmatpush1.msra.mxu0 0.0
  %410 = vmatprep.subr.mxu0 0.0
  %411 = vmatpush1.msra.mxu0 0.0
  %412 = vmatprep.subr.mxu0 0.0
  %413 = vmatpush1.msra.mxu0 0.0
  %414 = vmatprep.subr.mxu0 0.0
  %415 = vmatpush1.msra.mxu0 0.0
  %416 = vmatprep.subr.mxu0 0.0
  %417 = vmatpush1.msra.mxu0 0.0
  %418 = vmatprep.subr.mxu0 0.0
  %419 = vmatpush1.msra.mxu0 0.0
  %420 = vmatprep.subr.mxu0 0.0
  %421 = vmatpush1.msra.mxu0 0.0
  %422 = vmatprep.subr.mxu0 0.0
  %423 = vmatpush1.msra.mxu0 0.0
  %424 = vmatprep.subr.mxu0 0.0
  %425 = vmatpush1.msra.mxu0 0.0
  %426 = vmatprep.subr.mxu0 0.0
  %427 = vmatpush1.msra.mxu0 0.0
  %428 = vmatprep.subr.mxu0 0.0
  %429 = vmatpush1.msra.mxu0 0.0
  %430 = vmatprep.mubr.f32.mxu0 0.0
  %431 = vmatmul.mubr.f32.gmra.mrb[0].mxu0 %v364
  %v432 = vpop.f32.mrb[0].mxu0
  %v433 = vadd.f32 0.0, %v432
  %v434 = vpop.f32.mrb[0].mxu0
  %v435 = vadd.f32 0.0, %v434
  %436 = vdwg.mxu0
  %v437 = vadd.f32 %v361, %v433
  %v438 = vadd.f32 %v362, %v435
  %v439 = vxor.u32 %v437, 2147483648
  %v440 = vxor.u32 %v438, 2147483648
  %v441 = vmul.f32 %v439, 1.442695
  %v442 = vpow.pop %v441
  %v443 = vmul.f32 %v440, 1.442695
  %v444 = vpow.pop %v443
  %v445 = vadd.f32 %v442, 1.0
  %v446 = vadd.f32 %v444, 1.0
  %v447 = vrcp.pop %v445
  %v448 = vmul.f32 1.0, %v447
  %v449 = vrcp.pop %v446
  %v450 = vmul.f32 1.0, %v449
  %v451 = vtanh.pop %v438
  %v452 = vmul.f32 %v448, %v348
  %454 = vrot.lane.b32.xlu0 %v451, 64
  %v455 = vpop.permute.xlu0 %454
  %v457 = vmul.f32 %v448, %v455
  %459 = vrot.lane.b32.xlu0 %v457, 64
  %v460 = vpop.permute.xlu0 %459
  %v462 = vadd.f32 %v452, %v460
  %v463 = vtanh.pop %v462
  %465 = vrot.lane.b32.xlu0 %v463, 64
  %v466 = vpop.permute.xlu0 %465
  %v468 = vmul.f32 %v450, %v466
  %s469 = scalar_lea.vmem [#allocation3], 8
  %470 = vst.msk [vmem:[%s469] sm:$0xff] %vm355, %v468
  %s471 = scalar_lea.vmem [#allocation3], 48
  %472 = vst.msk [vmem:[%s471] sm:$0xff] %vm358, %v468
  %s473 = scalar_lea.vmem [#allocation2], 32
  %v474 = vld [vmem:[%s473] sm:$0xff]
  %v475 = vld [vmem:[%s473 + $0x8] sm:$0xff]
  %v477 = vsel %vm93, %v468, 0
  %479 = vmatprep.subr.mxu0 %v30
  %480 = vmatpush1.msra.mxu0 %v29
  %481 = vmatprep.subr.mxu0 %v32
  %482 = vmatpush1.msra.mxu0 %v31
  %483 = vmatprep.subr.mxu0 %v34
  %484 = vmatpush1.msra.mxu0 %v33
  %485 = vmatprep.subr.mxu0 %v36
  %486 = vmatpush1.msra.mxu0 %v35
  %487 = vmatprep.subr.mxu0 %v38
  %488 = vmatpush1.msra.mxu0 %v37
  %489 = vmatprep.subr.mxu0 %v40
  %490 = vmatpush1.msra.mxu0 %v39
  %491 = vmatprep.subr.mxu0 %v42
  %492 = vmatpush1.msra.mxu0 %v41
  %493 = vmatprep.subr.mxu0 %v44
  %494 = vmatpush1.msra.mxu0 %v43
  %495 = vmatprep.subr.mxu0 0.0
  %496 = vmatpush1.msra.mxu0 0.0
  %497 = vmatprep.subr.mxu0 0.0
  %498 = vmatpush1.msra.mxu0 0.0
  %499 = vmatprep.subr.mxu0 0.0
  %500 = vmatpush1.msra.mxu0 0.0
  %501 = vmatprep.subr.mxu0 0.0
  %502 = vmatpush1.msra.mxu0 0.0
  %503 = vmatprep.subr.mxu0 0.0
  %504 = vmatpush1.msra.mxu0 0.0
  %505 = vmatprep.subr.mxu0 0.0
  %506 = vmatpush1.msra.mxu0 0.0
  %507 = vmatprep.subr.mxu0 0.0
  %508 = vmatpush1.msra.mxu0 0.0
  %509 = vmatprep.subr.mxu0 0.0
  %510 = vmatpush1.msra.mxu0 0.0
  %511 = vmatprep.subr.mxu0 0.0
  %512 = vmatpush1.msra.mxu0 0.0
  %513 = vmatprep.subr.mxu0 0.0
  %514 = vmatpush1.msra.mxu0 0.0
  %515 = vmatprep.subr.mxu0 0.0
  %516 = vmatpush1.msra.mxu0 0.0
  %517 = vmatprep.subr.mxu0 0.0
  %518 = vmatpush1.msra.mxu0 0.0
  %519 = vmatprep.subr.mxu0 0.0
  %520 = vmatpush1.msra.mxu0 0.0
  %521 = vmatprep.subr.mxu0 0.0
  %522 = vmatpush1.msra.mxu0 0.0
  %523 = vmatprep.subr.mxu0 0.0
  %524 = vmatpush1.msra.mxu0 0.0
  %525 = vmatprep.subr.mxu0 0.0
  %526 = vmatpush1.msra.mxu0 0.0
  %527 = vmatprep.subr.mxu0 0.0
  %528 = vmatpush1.msra.mxu0 0.0
  %529 = vmatprep.subr.mxu0 0.0
  %530 = vmatpush1.msra.mxu0 0.0
  %531 = vmatprep.subr.mxu0 0.0
  %532 = vmatpush1.msra.mxu0 0.0
  %533 = vmatprep.subr.mxu0 0.0
  %534 = vmatpush1.msra.mxu0 0.0
  %535 = vmatprep.subr.mxu0 0.0
  %536 = vmatpush1.msra.mxu0 0.0
  %537 = vmatprep.subr.mxu0 0.0
  %538 = vmatpush1.msra.mxu0 0.0
  %539 = vmatprep.subr.mxu0 0.0
  %540 = vmatpush1.msra.mxu0 0.0
  %541 = vmatprep.subr.mxu0 0.0
  %542 = vmatpush1.msra.mxu0 0.0
  %543 = vmatprep.mubr.f32.mxu0 0.0
  %544 = vmatmul.mubr.f32.gmra.mrb[0].mxu0 %v477
  %v545 = vpop.f32.mrb[0].mxu0
  %v546 = vadd.f32 0.0, %v545
  %v547 = vpop.f32.mrb[0].mxu0
  %v548 = vadd.f32 0.0, %v547
  %549 = vdwg.mxu0
  %v550 = vadd.f32 %v474, %v546
  %v551 = vadd.f32 %v475, %v548
  %v552 = vxor.u32 %v550, 2147483648
  %v553 = vxor.u32 %v551, 2147483648
  %v554 = vmul.f32 %v552, 1.442695
  %v555 = vpow.pop %v554
  %v556 = vmul.f32 %v553, 1.442695
  %v557 = vpow.pop %v556
  %v558 = vadd.f32 %v555, 1.0
  %v559 = vadd.f32 %v557, 1.0
  %v560 = vrcp.pop %v558
  %v561 = vmul.f32 1.0, %v560
  %v562 = vrcp.pop %v559
  %v563 = vmul.f32 1.0, %v562
  %v564 = vtanh.pop %v551
  %v565 = vmul.f32 %v561, %v462
  %567 = vrot.lane.b32.xlu0 %v564, 64
  %v568 = vpop.permute.xlu0 %567
  %v570 = vmul.f32 %v561, %v568
  %572 = vrot.lane.b32.xlu0 %v570, 64
  %v573 = vpop.permute.xlu0 %572
  %v575 = vadd.f32 %v565, %v573
  %v576 = vtanh.pop %v575
  %578 = vrot.lane.b32.xlu0 %v576, 64
  %v579 = vpop.permute.xlu0 %578
  %v581 = vmul.f32 %v563, %v579
  %s582 = scalar_lea.vmem [#allocation3], 16
  %583 = vst.msk [vmem:[%s582] sm:$0xff] %vm355, %v581
  %s584 = scalar_lea.vmem [#allocation3], 40
  %585 = vst.msk [vmem:[%s584] sm:$0xff] %vm358, %v581
  %s586 = scalar_lea.vmem [#allocation2], 48
  %v587 = vld [vmem:[%s586] sm:$0xff]
  %v588 = vld [vmem:[%s586 + $0x8] sm:$0xff]
  %v590 = vsel %vm93, %v581, 0
  %592 = vmatprep.subr.mxu0 %v30
  %593 = vmatpush1.msra.mxu0 %v29
  %594 = vmatprep.subr.mxu0 %v32
  %595 = vmatpush1.msra.mxu0 %v31
  %596 = vmatprep.subr.mxu0 %v34
  %597 = vmatpush1.msra.mxu0 %v33
  %598 = vmatprep.subr.mxu0 %v36
  %599 = vmatpush1.msra.mxu0 %v35
  %600 = vmatprep.subr.mxu0 %v38
  %601 = vmatpush1.msra.mxu0 %v37
  %602 = vmatprep.subr.mxu0 %v40
  %603 = vmatpush1.msra.mxu0 %v39
  %604 = vmatprep.subr.mxu0 %v42
  %605 = vmatpush1.msra.mxu0 %v41
  %606 = vmatprep.subr.mxu0 %v44
  %607 = vmatpush1.msra.mxu0 %v43
  %608 = vmatprep.subr.mxu0 0.0
  %609 = vmatpush1.msra.mxu0 0.0
  %610 = vmatprep.subr.mxu0 0.0
  %611 = vmatpush1.msra.mxu0 0.0
  %612 = vmatprep.subr.mxu0 0.0
  %613 = vmatpush1.msra.mxu0 0.0
  %614 = vmatprep.subr.mxu0 0.0
  %615 = vmatpush1.msra.mxu0 0.0
  %616 = vmatprep.subr.mxu0 0.0
  %617 = vmatpush1.msra.mxu0 0.0
  %618 = vmatprep.subr.mxu0 0.0
  %619 = vmatpush1.msra.mxu0 0.0
  %620 = vmatprep.subr.mxu0 0.0
  %621 = vmatpush1.msra.mxu0 0.0
  %622 = vmatprep.subr.mxu0 0.0
  %623 = vmatpush1.msra.mxu0 0.0
  %624 = vmatprep.subr.mxu0 0.0
  %625 = vmatpush1.msra.mxu0 0.0
  %626 = vmatprep.subr.mxu0 0.0
  %627 = vmatpush1.msra.mxu0 0.0
  %628 = vmatprep.subr.mxu0 0.0
  %629 = vmatpush1.msra.mxu0 0.0
  %630 = vmatprep.subr.mxu0 0.0
  %631 = vmatpush1.msra.mxu0 0.0
  %632 = vmatprep.subr.mxu0 0.0
  %633 = vmatpush1.msra.mxu0 0.0
  %634 = vmatprep.subr.mxu0 0.0
  %635 = vmatpush1.msra.mxu0 0.0
  %636 = vmatprep.subr.mxu0 0.0
  %637 = vmatpush1.msra.mxu0 0.0
  %638 = vmatprep.subr.mxu0 0.0
  %639 = vmatpush1.msra.mxu0 0.0
  %640 = vmatprep.subr.mxu0 0.0
  %641 = vmatpush1.msra.mxu0 0.0
  %642 = vmatprep.subr.mxu0 0.0
  %643 = vmatpush1.msra.mxu0 0.0
  %644 = vmatprep.subr.mxu0 0.0
  %645 = vmatpush1.msra.mxu0 0.0
  %646 = vmatprep.subr.mxu0 0.0
  %647 = vmatpush1.msra.mxu0 0.0
  %648 = vmatprep.subr.mxu0 0.0
  %649 = vmatpush1.msra.mxu0 0.0
  %650 = vmatprep.subr.mxu0 0.0
  %651 = vmatpush1.msra.mxu0 0.0
  %652 = vmatprep.subr.mxu0 0.0
  %653 = vmatpush1.msra.mxu0 0.0
  %654 = vmatprep.subr.mxu0 0.0
  %655 = vmatpush1.msra.mxu0 0.0
  %656 = vmatprep.mubr.f32.mxu0 0.0
  %657 = vmatmul.mubr.f32.gmra.mrb[0].mxu0 %v590
  %v658 = vpop.f32.mrb[0].mxu0
  %v659 = vadd.f32 0.0, %v658
  %v660 = vpop.f32.mrb[0].mxu0
  %v661 = vadd.f32 0.0, %v660
  %662 = vdwg.mxu0
  %v663 = vadd.f32 %v587, %v659
  %v664 = vadd.f32 %v588, %v661
  %v665 = vxor.u32 %v663, 2147483648
  %v666 = vxor.u32 %v664, 2147483648
  %v667 = vmul.f32 %v665, 1.442695
  %v668 = vpow.pop %v667
  %v669 = vmul.f32 %v666, 1.442695
  %v670 = vpow.pop %v669
  %v671 = vadd.f32 %v668, 1.0
  %v672 = vadd.f32 %v670, 1.0
  %v673 = vrcp.pop %v671
  %v674 = vmul.f32 1.0, %v673
  %v675 = vrcp.pop %v672
  %v676 = vmul.f32 1.0, %v675
  %v677 = vtanh.pop %v664
  %v678 = vmul.f32 %v674, %v575
  %680 = vrot.lane.b32.xlu0 %v677, 64
  %v681 = vpop.permute.xlu0 %680
  %v683 = vmul.f32 %v674, %v681
  %685 = vrot.lane.b32.xlu0 %v683, 64
  %v686 = vpop.permute.xlu0 %685
  %v688 = vadd.f32 %v678, %v686
  %v689 = vtanh.pop %v688
  %691 = vrot.lane.b32.xlu0 %v689, 64
  %v692 = vpop.permute.xlu0 %691
  %v694 = vmul.f32 %v676, %v692
  %s695 = scalar_lea.vmem [#allocation3], 24
  %696 = vst.msk [vmem:[%s695] sm:$0xff] %vm355, %v694
  %s697 = scalar_lea.vmem [#allocation3], 32
  %698 = vst.msk [vmem:[%s697] sm:$0xff] %vm358, %v694
  %s699 = scalar_lea.vmem [#allocation2], 64
  %v700 = vld [vmem:[%s699] sm:$0xff]
  %v701 = vld [vmem:[%s699 + $0x8] sm:$0xff]
  %v703 = vsel %vm93, %v694, 0
  %705 = vmatprep.subr.mxu0 %v30
  %706 = vmatpush1.msra.mxu0 %v29
  %707 = vmatprep.subr.mxu0 %v32
  %708 = vmatpush1.msra.mxu0 %v31
  %709 = vmatprep.subr.mxu0 %v34
  %710 = vmatpush1.msra.mxu0 %v33
  %711 = vmatprep.subr.mxu0 %v36
  %712 = vmatpush1.msra.mxu0 %v35
  %713 = vmatprep.subr.mxu0 %v38
  %714 = vmatpush1.msra.mxu0 %v37
  %715 = vmatprep.subr.mxu0 %v40
  %716 = vmatpush1.msra.mxu0 %v39
  %717 = vmatprep.subr.mxu0 %v42
  %718 = vmatpush1.msra.mxu0 %v41
  %719 = vmatprep.subr.mxu0 %v44
  %720 = vmatpush1.msra.mxu0 %v43
  %721 = vmatprep.subr.mxu0 0.0
  %722 = vmatpush1.msra.mxu0 0.0
  %723 = vmatprep.subr.mxu0 0.0
  %724 = vmatpush1.msra.mxu0 0.0
  %725 = vmatprep.subr.mxu0 0.0
  %726 = vmatpush1.msra.mxu0 0.0
  %727 = vmatprep.subr.mxu0 0.0
  %728 = vmatpush1.msra.mxu0 0.0
  %729 = vmatprep.subr.mxu0 0.0
  %730 = vmatpush1.msra.mxu0 0.0
  %731 = vmatprep.subr.mxu0 0.0
  %732 = vmatpush1.msra.mxu0 0.0
  %733 = vmatprep.subr.mxu0 0.0
  %734 = vmatpush1.msra.mxu0 0.0
  %735 = vmatprep.subr.mxu0 0.0
  %736 = vmatpush1.msra.mxu0 0.0
  %737 = vmatprep.subr.mxu0 0.0
  %738 = vmatpush1.msra.mxu0 0.0
  %739 = vmatprep.subr.mxu0 0.0
  %740 = vmatpush1.msra.mxu0 0.0
  %741 = vmatprep.subr.mxu0 0.0
  %742 = vmatpush1.msra.mxu0 0.0
  %743 = vmatprep.subr.mxu0 0.0
  %744 = vmatpush1.msra.mxu0 0.0
  %745 = vmatprep.subr.mxu0 0.0
  %746 = vmatpush1.msra.mxu0 0.0
  %747 = vmatprep.subr.mxu0 0.0
  %748 = vmatpush1.msra.mxu0 0.0
  %749 = vmatprep.subr.mxu0 0.0
  %750 = vmatpush1.msra.mxu0 0.0
  %751 = vmatprep.subr.mxu0 0.0
  %752 = vmatpush1.msra.mxu0 0.0
  %753 = vmatprep.subr.mxu0 0.0
  %754 = vmatpush1.msra.mxu0 0.0
  %755 = vmatprep.subr.mxu0 0.0
  %756 = vmatpush1.msra.mxu0 0.0
  %757 = vmatprep.subr.mxu0 0.0
  %758 = vmatpush1.msra.mxu0 0.0
  %759 = vmatprep.subr.mxu0 0.0
  %760 = vmatpush1.msra.mxu0 0.0
  %761 = vmatprep.subr.mxu0 0.0
  %762 = vmatpush1.msra.mxu0 0.0
  %763 = vmatprep.subr.mxu0 0.0
  %764 = vmatpush1.msra.mxu0 0.0
  %765 = vmatprep.subr.mxu0 0.0
  %766 = vmatpush1.msra.mxu0 0.0
  %767 = vmatprep.subr.mxu0 0.0
  %768 = vmatpush1.msra.mxu0 0.0
  %769 = vmatprep.mubr.f32.mxu0 0.0
  %770 = vmatmul.mubr.f32.gmra.mrb[0].mxu0 %v703
  %v771 = vpop.f32.mrb[0].mxu0
  %v772 = vadd.f32 0.0, %v771
  %v773 = vpop.f32.mrb[0].mxu0
  %v774 = vadd.f32 0.0, %v773
  %775 = vdwg.mxu0
  %v776 = vadd.f32 %v700, %v772
  %v777 = vadd.f32 %v701, %v774
  %v778 = vxor.u32 %v776, 2147483648
  %v779 = vxor.u32 %v777, 2147483648
  %v780 = vmul.f32 %v778, 1.442695
  %v781 = vpow.pop %v780
  %v782 = vmul.f32 %v779, 1.442695
  %v783 = vpow.pop %v782
  %v784 = vadd.f32 %v781, 1.0
  %v785 = vadd.f32 %v783, 1.0
  %v786 = vrcp.pop %v784
  %v787 = vmul.f32 1.0, %v786
  %v788 = vrcp.pop %v785
  %v789 = vmul.f32 1.0, %v788
  %v790 = vtanh.pop %v777
  %v791 = vmul.f32 %v787, %v688
  %793 = vrot.lane.b32.xlu0 %v790, 64
  %v794 = vpop.permute.xlu0 %793
  %v796 = vmul.f32 %v787, %v794
  %798 = vrot.lane.b32.xlu0 %v796, 64
  %v799 = vpop.permute.xlu0 %798
  %v801 = vadd.f32 %v791, %v799
  %v802 = vtanh.pop %v801
  %804 = vrot.lane.b32.xlu0 %v802, 64
  %v805 = vpop.permute.xlu0 %804
  %v807 = vmul.f32 %v789, %v805
  %808 = vst.msk [vmem:[%s697] sm:$0xff] %vm355, %v807
  %809 = vst.msk [vmem:[%s695] sm:$0xff] %vm358, %v807
  %s810 = scalar_lea.vmem [#allocation2], 80
  %v811 = vld [vmem:[%s810] sm:$0xff]
  %v812 = vld [vmem:[%s810 + $0x8] sm:$0xff]
  %v814 = vsel %vm93, %v807, 0
  %816 = vmatprep.subr.mxu0 %v30
  %817 = vmatpush1.msra.mxu0 %v29
  %818 = vmatprep.subr.mxu0 %v32
  %819 = vmatpush1.msra.mxu0 %v31
  %820 = vmatprep.subr.mxu0 %v34
  %821 = vmatpush1.msra.mxu0 %v33
  %822 = vmatprep.subr.mxu0 %v36
  %823 = vmatpush1.msra.mxu0 %v35
  %824 = vmatprep.subr.mxu0 %v38
  %825 = vmatpush1.msra.mxu0 %v37
  %826 = vmatprep.subr.mxu0 %v40
  %827 = vmatpush1.msra.mxu0 %v39
  %828 = vmatprep.subr.mxu0 %v42
  %829 = vmatpush1.msra.mxu0 %v41
  %830 = vmatprep.subr.mxu0 %v44
  %831 = vmatpush1.msra.mxu0 %v43
  %832 = vmatprep.subr.mxu0 0.0
  %833 = vmatpush1.msra.mxu0 0.0
  %834 = vmatprep.subr.mxu0 0.0
  %835 = vmatpush1.msra.mxu0 0.0
  %836 = vmatprep.subr.mxu0 0.0
  %837 = vmatpush1.msra.mxu0 0.0
  %838 = vmatprep.subr.mxu0 0.0
  %839 = vmatpush1.msra.mxu0 0.0
  %840 = vmatprep.subr.mxu0 0.0
  %841 = vmatpush1.msra.mxu0 0.0
  %842 = vmatprep.subr.mxu0 0.0
  %843 = vmatpush1.msra.mxu0 0.0
  %844 = vmatprep.subr.mxu0 0.0
  %845 = vmatpush1.msra.mxu0 0.0
  %846 = vmatprep.subr.mxu0 0.0
  %847 = vmatpush1.msra.mxu0 0.0
  %848 = vmatprep.subr.mxu0 0.0
  %849 = vmatpush1.msra.mxu0 0.0
  %850 = vmatprep.subr.mxu0 0.0
  %851 = vmatpush1.msra.mxu0 0.0
  %852 = vmatprep.subr.mxu0 0.0
  %853 = vmatpush1.msra.mxu0 0.0
  %854 = vmatprep.subr.mxu0 0.0
  %855 = vmatpush1.msra.mxu0 0.0
  %856 = vmatprep.subr.mxu0 0.0
  %857 = vmatpush1.msra.mxu0 0.0
  %858 = vmatprep.subr.mxu0 0.0
  %859 = vmatpush1.msra.mxu0 0.0
  %860 = vmatprep.subr.mxu0 0.0
  %861 = vmatpush1.msra.mxu0 0.0
  %862 = vmatprep.subr.mxu0 0.0
  %863 = vmatpush1.msra.mxu0 0.0
  %864 = vmatprep.subr.mxu0 0.0
  %865 = vmatpush1.msra.mxu0 0.0
  %866 = vmatprep.subr.mxu0 0.0
  %867 = vmatpush1.msra.mxu0 0.0
  %868 = vmatprep.subr.mxu0 0.0
  %869 = vmatpush1.msra.mxu0 0.0
  %870 = vmatprep.subr.mxu0 0.0
  %871 = vmatpush1.msra.mxu0 0.0
  %872 = vmatprep.subr.mxu0 0.0
  %873 = vmatpush1.msra.mxu0 0.0
  %874 = vmatprep.subr.mxu0 0.0
  %875 = vmatpush1.msra.mxu0 0.0
  %876 = vmatprep.subr.mxu0 0.0
  %877 = vmatpush1.msra.mxu0 0.0
  %878 = vmatprep.subr.mxu0 0.0
  %879 = vmatpush1.msra.mxu0 0.0
  %880 = vmatprep.mubr.f32.mxu0 0.0
  %881 = vmatmul.mubr.f32.gmra.mrb[0].mxu0 %v814
  %v882 = vpop.f32.mrb[0].mxu0
  %v883 = vadd.f32 0.0, %v882
  %v884 = vpop.f32.mrb[0].mxu0
  %v885 = vadd.f32 0.0, %v884
  %886 = vdwg.mxu0
  %v887 = vadd.f32 %v811, %v883
  %v888 = vadd.f32 %v812, %v885
  %v889 = vxor.u32 %v887, 2147483648
  %v890 = vxor.u32 %v888, 2147483648
  %v891 = vmul.f32 %v889, 1.442695
  %v892 = vpow.pop %v891
  %v893 = vmul.f32 %v890, 1.442695
  %v894 = vpow.pop %v893
  %v895 = vadd.f32 %v892, 1.0
  %v896 = vadd.f32 %v894, 1.0
  %v897 = vrcp.pop %v895
  %v898 = vmul.f32 1.0, %v897
  %v899 = vrcp.pop %v896
  %v900 = vmul.f32 1.0, %v899
  %v901 = vtanh.pop %v888
  %v902 = vmul.f32 %v898, %v801
  %904 = vrot.lane.b32.xlu0 %v901, 64
  %v905 = vpop.permute.xlu0 %904
  %v907 = vmul.f32 %v898, %v905
  %909 = vrot.lane.b32.xlu0 %v907, 64
  %v910 = vpop.permute.xlu0 %909
  %v912 = vadd.f32 %v902, %v910
  %v913 = vtanh.pop %v912
  %915 = vrot.lane.b32.xlu0 %v913, 64
  %v916 = vpop.permute.xlu0 %915
  %v918 = vmul.f32 %v900, %v916
  %919 = vst.msk [vmem:[%s584] sm:$0xff] %vm355, %v918
  %920 = vst.msk [vmem:[%s582] sm:$0xff] %vm358, %v918
  %s921 = scalar_lea.vmem [#allocation2], 96
  %v922 = vld [vmem:[%s921] sm:$0xff]
  %v923 = vld [vmem:[%s921 + $0x8] sm:$0xff]
  %v925 = vsel %vm93, %v918, 0
  %927 = vmatprep.subr.mxu0 %v30
  %928 = vmatpush1.msra.mxu0 %v29
  %929 = vmatprep.subr.mxu0 %v32
  %930 = vmatpush1.msra.mxu0 %v31
  %931 = vmatprep.subr.mxu0 %v34
  %932 = vmatpush1.msra.mxu0 %v33
  %933 = vmatprep.subr.mxu0 %v36
  %934 = vmatpush1.msra.mxu0 %v35
  %935 = vmatprep.subr.mxu0 %v38
  %936 = vmatpush1.msra.mxu0 %v37
  %937 = vmatprep.subr.mxu0 %v40
  %938 = vmatpush1.msra.mxu0 %v39
  %939 = vmatprep.subr.mxu0 %v42
  %940 = vmatpush1.msra.mxu0 %v41
  %941 = vmatprep.subr.mxu0 %v44
  %942 = vmatpush1.msra.mxu0 %v43
  %943 = vmatprep.subr.mxu0 0.0
  %944 = vmatpush1.msra.mxu0 0.0
  %945 = vmatprep.subr.mxu0 0.0
  %946 = vmatpush1.msra.mxu0 0.0
  %947 = vmatprep.subr.mxu0 0.0
  %948 = vmatpush1.msra.mxu0 0.0
  %949 = vmatprep.subr.mxu0 0.0
  %950 = vmatpush1.msra.mxu0 0.0
  %951 = vmatprep.subr.mxu0 0.0
  %952 = vmatpush1.msra.mxu0 0.0
  %953 = vmatprep.subr.mxu0 0.0
  %954 = vmatpush1.msra.mxu0 0.0
  %955 = vmatprep.subr.mxu0 0.0
  %956 = vmatpush1.msra.mxu0 0.0
  %957 = vmatprep.subr.mxu0 0.0
  %958 = vmatpush1.msra.mxu0 0.0
  %959 = vmatprep.subr.mxu0 0.0
  %960 = vmatpush1.msra.mxu0 0.0
  %961 = vmatprep.subr.mxu0 0.0
  %962 = vmatpush1.msra.mxu0 0.0
  %963 = vmatprep.subr.mxu0 0.0
  %964 = vmatpush1.msra.mxu0 0.0
  %965 = vmatprep.subr.mxu0 0.0
  %966 = vmatpush1.msra.mxu0 0.0
  %967 = vmatprep.subr.mxu0 0.0
  %968 = vmatpush1.msra.mxu0 0.0
  %969 = vmatprep.subr.mxu0 0.0
  %970 = vmatpush1.msra.mxu0 0.0
  %971 = vmatprep.subr.mxu0 0.0
  %972 = vmatpush1.msra.mxu0 0.0
  %973 = vmatprep.subr.mxu0 0.0
  %974 = vmatpush1.msra.mxu0 0.0
  %975 = vmatprep.subr.mxu0 0.0
  %976 = vmatpush1.msra.mxu0 0.0
  %977 = vmatprep.subr.mxu0 0.0
  %978 = vmatpush1.msra.mxu0 0.0
  %979 = vmatprep.subr.mxu0 0.0
  %980 = vmatpush1.msra.mxu0 0.0
  %981 = vmatprep.subr.mxu0 0.0
  %982 = vmatpush1.msra.mxu0 0.0
  %983 = vmatprep.subr.mxu0 0.0
  %984 = vmatpush1.msra.mxu0 0.0
  %985 = vmatprep.subr.mxu0 0.0
  %986 = vmatpush1.msra.mxu0 0.0
  %987 = vmatprep.subr.mxu0 0.0
  %988 = vmatpush1.msra.mxu0 0.0
  %989 = vmatprep.subr.mxu0 0.0
  %990 = vmatpush1.msra.mxu0 0.0
  %991 = vmatprep.mubr.f32.mxu0 0.0
  %992 = vmatmul.mubr.f32.gmra.mrb[0].mxu0 %v925
  %v993 = vpop.f32.mrb[0].mxu0
  %v994 = vadd.f32 0.0, %v993
  %v995 = vpop.f32.mrb[0].mxu0
  %v996 = vadd.f32 0.0, %v995
  %997 = vdwg.mxu0
  %v998 = vadd.f32 %v922, %v994
  %v999 = vadd.f32 %v923, %v996
  %v1000 = vxor.u32 %v998, 2147483648
  %v1001 = vxor.u32 %v999, 2147483648
  %v1002 = vmul.f32 %v1000, 1.442695
  %v1003 = vpow.pop %v1002
  %v1004 = vmul.f32 %v1001, 1.442695
  %v1005 = vpow.pop %v1004
  %v1006 = vadd.f32 %v1003, 1.0
  %v1007 = vadd.f32 %v1005, 1.0
  %v1008 = vrcp.pop %v1006
  %v1009 = vmul.f32 1.0, %v1008
  %v1010 = vrcp.pop %v1007
  %v1011 = vmul.f32 1.0, %v1010
  %v1012 = vtanh.pop %v999
  %v1013 = vmul.f32 %v1009, %v912
  %1015 = vrot.lane.b32.xlu0 %v1012, 64
  %v1016 = vpop.permute.xlu0 %1015
  %v1018 = vmul.f32 %v1009, %v1016
  %1020 = vrot.lane.b32.xlu0 %v1018, 64
  %v1021 = vpop.permute.xlu0 %1020
  %v1023 = vadd.f32 %v1013, %v1021
  %v1024 = vtanh.pop %v1023
  %1026 = vrot.lane.b32.xlu0 %v1024, 64
  %v1027 = vpop.permute.xlu0 %1026
  %v1029 = vmul.f32 %v1011, %v1027
  %1030 = vst.msk [vmem:[%s471] sm:$0xff] %vm355, %v1029
  %1031 = vst.msk [vmem:[%s469] sm:$0xff] %vm358, %v1029
  %s1032 = scalar_lea.vmem [#allocation2], 112
  %v1033 = vld [vmem:[%s1032] sm:$0xff]
  %v1034 = vld [vmem:[%s1032 + $0x8] sm:$0xff]
  %v1036 = vsel %vm93, %v1029, 0
  %1038 = vmatprep.subr.mxu0 %v30
  %1039 = vmatpush1.msra.mxu0 %v29
  %1040 = vmatprep.subr.mxu0 %v32
  %1041 = vmatpush1.msra.mxu0 %v31
  %1042 = vmatprep.subr.mxu0 %v34
  %1043 = vmatpush1.msra.mxu0 %v33
  %1044 = vmatprep.subr.mxu0 %v36
  %1045 = vmatpush1.msra.mxu0 %v35
  %1046 = vmatprep.subr.mxu0 %v38
  %1047 = vmatpush1.msra.mxu0 %v37
  %1048 = vmatprep.subr.mxu0 %v40
  %1049 = vmatpush1.msra.mxu0 %v39
  %1050 = vmatprep.subr.mxu0 %v42
  %1051 = vmatpush1.msra.mxu0 %v41
  %1052 = vmatprep.subr.mxu0 %v44
  %1053 = vmatpush1.msra.mxu0 %v43
  %1054 = vmatprep.subr.mxu0 0.0
  %1055 = vmatpush1.msra.mxu0 0.0
  %1056 = vmatprep.subr.mxu0 0.0
  %1057 = vmatpush1.msra.mxu0 0.0
  %1058 = vmatprep.subr.mxu0 0.0
  %1059 = vmatpush1.msra.mxu0 0.0
  %1060 = vmatprep.subr.mxu0 0.0
  %1061 = vmatpush1.msra.mxu0 0.0
  %1062 = vmatprep.subr.mxu0 0.0
  %1063 = vmatpush1.msra.mxu0 0.0
  %1064 = vmatprep.subr.mxu0 0.0
  %1065 = vmatpush1.msra.mxu0 0.0
  %1066 = vmatprep.subr.mxu0 0.0
  %1067 = vmatpush1.msra.mxu0 0.0
  %1068 = vmatprep.subr.mxu0 0.0
  %1069 = vmatpush1.msra.mxu0 0.0
  %1070 = vmatprep.subr.mxu0 0.0
  %1071 = vmatpush1.msra.mxu0 0.0
  %1072 = vmatprep.subr.mxu0 0.0
  %1073 = vmatpush1.msra.mxu0 0.0
  %1074 = vmatprep.subr.mxu0 0.0
  %1075 = vmatpush1.msra.mxu0 0.0
  %1076 = vmatprep.subr.mxu0 0.0
  %1077 = vmatpush1.msra.mxu0 0.0
  %1078 = vmatprep.subr.mxu0 0.0
  %1079 = vmatpush1.msra.mxu0 0.0
  %1080 = vmatprep.subr.mxu0 0.0
  %1081 = vmatpush1.msra.mxu0 0.0
  %1082 = vmatprep.subr.mxu0 0.0
  %1083 = vmatpush1.msra.mxu0 0.0
  %1084 = vmatprep.subr.mxu0 0.0
  %1085 = vmatpush1.msra.mxu0 0.0
  %1086 = vmatprep.subr.mxu0 0.0
  %1087 = vmatpush1.msra.mxu0 0.0
  %1088 = vmatprep.subr.mxu0 0.0
  %1089 = vmatpush1.msra.mxu0 0.0
  %1090 = vmatprep.subr.mxu0 0.0
  %1091 = vmatpush1.msra.mxu0 0.0
  %1092 = vmatprep.subr.mxu0 0.0
  %1093 = vmatpush1.msra.mxu0 0.0
  %1094 = vmatprep.subr.mxu0 0.0
  %1095 = vmatpush1.msra.mxu0 0.0
  %1096 = vmatprep.subr.mxu0 0.0
  %1097 = vmatpush1.msra.mxu0 0.0
  %1098 = vmatprep.subr.mxu0 0.0
  %1099 = vmatpush1.msra.mxu0 0.0
  %1100 = vmatprep.subr.mxu0 0.0
  %1101 = vmatpush1.msra.mxu0 0.0
  %1102 = vmatprep.mubr.f32.mxu0 0.0
  %1103 = vmatmul.mubr.f32.gmra.mrb[0].mxu0 %v1036
  %v1104 = vpop.f32.mrb[0].mxu0
  %v1105 = vadd.f32 0.0, %v1104
  %v1106 = vpop.f32.mrb[0].mxu0
  %v1107 = vadd.f32 0.0, %v1106
  %1108 = vdwg.mxu0
  %v1109 = vadd.f32 %v1033, %v1105
  %v1110 = vadd.f32 %v1034, %v1107
  %v1111 = vxor.u32 %v1109, 2147483648
  %v1112 = vxor.u32 %v1110, 2147483648
  %v1113 = vmul.f32 %v1111, 1.442695
  %v1114 = vpow.pop %v1113
  %v1115 = vmul.f32 %v1112, 1.442695
  %v1116 = vpow.pop %v1115
  %v1117 = vadd.f32 %v1114, 1.0
  %v1118 = vadd.f32 %v1116, 1.0
  %v1119 = vrcp.pop %v1117
  %v1120 = vmul.f32 1.0, %v1119
  %v1121 = vrcp.pop %v1118
  %v1122 = vmul.f32 1.0, %v1121
  %v1123 = vtanh.pop %v1110
  %v1124 = vmul.f32 %v1120, %v1023
  %1126 = vrot.lane.b32.xlu0 %v1123, 64
  %v1127 = vpop.permute.xlu0 %1126
  %v1129 = vmul.f32 %v1120, %v1127
  %1131 = vrot.lane.b32.xlu0 %v1129, 64
  %v1132 = vpop.permute.xlu0 %1131
  %v1134 = vadd.f32 %v1124, %v1132
  %v1135 = vtanh.pop %v1134
  %1137 = vrot.lane.b32.xlu0 %v1135, 64
  %v1138 = vpop.permute.xlu0 %1137
  %v1140 = vmul.f32 %v1122, %v1138
  %1141 = vst.msk [vmem:[%s357] sm:$0xff] %vm355, %v1140
  %1142 = vst.msk [vmem:[#allocation3] sm:$0xff] %vm358, %v1140
  %v1143 = vld [vmem:[#allocation3] sm:$0xff]
  %v1144 = vld [vmem:[#allocation3 + $0x8] sm:$0xff]
  %v1145 = vld [vmem:[#allocation3 + $0x10] sm:$0xff]
  %v1146 = vld [vmem:[#allocation3 + $0x18] sm:$0xff]
  %v1147 = vld [vmem:[#allocation3 + $0x20] sm:$0xff]
  %v1148 = vld [vmem:[#allocation3 + $0x28] sm:$0xff]
  %v1149 = vld [vmem:[#allocation3 + $0x30] sm:$0xff]
  %v1150 = vld [vmem:[#allocation3 + $0x38] sm:$0xff]
  %v1152 = vlaneseq
  %v1153 = vshrl.u32 %v1152, 7
  %v1154 = vsub.s32 0, %v1153
  %v1155 = vrot.slane %v53, %v1154
  %v1158 = vsel %vm93, %v1143, 0
  %v1161 = vsel %vm93, %v1144, 0
  %v1164 = vsel %vm93, %v1145, 0
  %v1167 = vsel %vm93, %v1146, 0
  %v1170 = vsel %vm93, %v1147, 0
  %v1173 = vsel %vm93, %v1148, 0
  %v1176 = vsel %vm93, %v1149, 0
  %v1179 = vsel %vm93, %v1150, 0
  %1181 = vmatprep.subr.mxu0 0.0
  %1182 = vmatpush1.msra.mxu0 %v45
  %1183 = vmatprep.subr.mxu0 0.0
  %1184 = vmatpush1.msra.mxu0 %v46
  %1185 = vmatprep.subr.mxu0 0.0
  %1186 = vmatpush1.msra.mxu0 %v47
  %1187 = vmatprep.subr.mxu0 0.0
  %1188 = vmatpush1.msra.mxu0 %v48
  %1189 = vmatprep.subr.mxu0 0.0
  %1190 = vmatpush1.msra.mxu0 %v49
  %1191 = vmatprep.subr.mxu0 0.0
  %1192 = vmatpush1.msra.mxu0 %v50
  %1193 = vmatprep.subr.mxu0 0.0
  %1194 = vmatpush1.msra.mxu0 %v51
  %1195 = vmatprep.subr.mxu0 0.0
  %1196 = vmatpush1.msra.mxu0 %v52
  %1197 = vmatprep.subr.mxu0 0.0
  %1198 = vmatpush1.msra.mxu0 0.0
  %1199 = vmatprep.subr.mxu0 0.0
  %1200 = vmatpush1.msra.mxu0 0.0
  %1201 = vmatprep.subr.mxu0 0.0
  %1202 = vmatpush1.msra.mxu0 0.0
  %1203 = vmatprep.subr.mxu0 0.0
  %1204 = vmatpush1.msra.mxu0 0.0
  %1205 = vmatprep.subr.mxu0 0.0
  %1206 = vmatpush1.msra.mxu0 0.0
  %1207 = vmatprep.subr.mxu0 0.0
  %1208 = vmatpush1.msra.mxu0 0.0
  %1209 = vmatprep.subr.mxu0 0.0
  %1210 = vmatpush1.msra.mxu0 0.0
  %1211 = vmatprep.subr.mxu0 0.0
  %1212 = vmatpush1.msra.mxu0 0.0
  %1213 = vmatprep.subr.mxu0 0.0
  %1214 = vmatpush1.msra.mxu0 0.0
  %1215 = vmatprep.subr.mxu0 0.0
  %1216 = vmatpush1.msra.mxu0 0.0
  %1217 = vmatprep.subr.mxu0 0.0
  %1218 = vmatpush1.msra.mxu0 0.0
  %1219 = vmatprep.subr.mxu0 0.0
  %1220 = vmatpush1.msra.mxu0 0.0
  %1221 = vmatprep.subr.mxu0 0.0
  %1222 = vmatpush1.msra.mxu0 0.0
  %1223 = vmatprep.subr.mxu0 0.0
  %1224 = vmatpush1.msra.mxu0 0.0
  %1225 = vmatprep.subr.mxu0 0.0
  %1226 = vmatpush1.msra.mxu0 0.0
  %1227 = vmatprep.subr.mxu0 0.0
  %1228 = vmatpush1.msra.mxu0 0.0
  %1229 = vmatprep.subr.mxu0 0.0
  %1230 = vmatpush1.msra.mxu0 0.0
  %1231 = vmatprep.subr.mxu0 0.0
  %1232 = vmatpush1.msra.mxu0 0.0
  %1233 = vmatprep.subr.mxu0 0.0
  %1234 = vmatpush1.msra.mxu0 0.0
  %1235 = vmatprep.subr.mxu0 0.0
  %1236 = vmatpush1.msra.mxu0 0.0
  %1237 = vmatprep.subr.mxu0 0.0
  %1238 = vmatpush1.msra.mxu0 0.0
  %1239 = vmatprep.subr.mxu0 0.0
  %1240 = vmatpush1.msra.mxu0 0.0
  %1241 = vmatprep.subr.mxu0 0.0
  %1242 = vmatpush1.msra.mxu0 0.0
  %1243 = vmatprep.subr.mxu0 0.0
  %1244 = vmatpush1.msra.mxu0 0.0
  %1245 = vmatprep.mubr.f32.mxu0 0.0
  %1246 = vmatmul.mubr.f32.gmra.mrb[0].mxu0 %v1158
  %v1247 = vpop.f32.mrb[0].mxu0
  %v1248 = vadd.f32 %v1155, %v1247
  %v1249 = vpop.f32.mrb[0].mxu0
  %1250 = vmatprep.mubr.f32.mxu0 0.0
  %1251 = vmatmul.mubr.f32.gmra.mrb[0].mxu0 %v1161
  %v1252 = vpop.f32.mrb[0].mxu0
  %v1253 = vadd.f32 %v1155, %v1252
  %v1254 = vpop.f32.mrb[0].mxu0
  %1255 = vmatprep.mubr.f32.mxu0 0.0
  %1256 = vmatmul.mubr.f32.gmra.mrb[0].mxu0 %v1164
  %v1257 = vpop.f32.mrb[0].mxu0
  %v1258 = vadd.f32 %v1155, %v1257
  %v1259 = vpop.f32.mrb[0].mxu0
  %1260 = vmatprep.mubr.f32.mxu0 0.0
  %1261 = vmatmul.mubr.f32.gmra.mrb[0].mxu0 %v1167
  %v1262 = vpop.f32.mrb[0].mxu0
  %v1263 = vadd.f32 %v1155, %v1262
  %v1264 = vpop.f32.mrb[0].mxu0
  %1265 = vmatprep.mubr.f32.mxu0 0.0
  %1266 = vmatmul.mubr.f32.gmra.mrb[0].mxu0 %v1170
  %v1267 = vpop.f32.mrb[0].mxu0
  %v1268 = vadd.f32 %v1155, %v1267
  %v1269 = vpop.f32.mrb[0].mxu0
  %1270 = vmatprep.mubr.f32.mxu0 0.0
  %1271 = vmatmul.mubr.f32.gmra.mrb[0].mxu0 %v1173
  %v1272 = vpop.f32.mrb[0].mxu0
  %v1273 = vadd.f32 %v1155, %v1272
  %v1274 = vpop.f32.mrb[0].mxu0
  %1275 = vmatprep.mubr.f32.mxu0 0.0
  %1276 = vmatmul.mubr.f32.gmra.mrb[0].mxu0 %v1176
  %v1277 = vpop.f32.mrb[0].mxu0
  %v1278 = vadd.f32 %v1155, %v1277
  %v1279 = vpop.f32.mrb[0].mxu0
  %1280 = vmatprep.mubr.f32.mxu0 0.0
  %1281 = vmatmul.mubr.f32.gmra.mrb[0].mxu0 %v1179
  %v1282 = vpop.f32.mrb[0].mxu0
  %v1283 = vadd.f32 %v1155, %v1282
  %v1284 = vpop.f32.mrb[0].mxu0
  %1285 = vdwg.mxu0
  %vm1286 = vcmp.gt.f32.partialorder %v1248, 0.0
  %vm1287 = vcmp.gt.f32.partialorder %v1253, 0.0
  %vm1288 = vcmp.gt.f32.partialorder %v1258, 0.0
  %vm1289 = vcmp.gt.f32.partialorder %v1263, 0.0
  %vm1290 = vcmp.gt.f32.partialorder %v1268, 0.0
  %vm1291 = vcmp.gt.f32.partialorder %v1273, 0.0
  %vm1292 = vcmp.gt.f32.partialorder %v1278, 0.0
  %vm1293 = vcmp.gt.f32.partialorder %v1283, 0.0
  %v1294 = vmin.f32 %v1248, 0.0
  %v1295 = vmin.f32 %v1253, 0.0
  %v1296 = vmin.f32 %v1258, 0.0
  %v1297 = vmin.f32 %v1263, 0.0
  %v1298 = vmin.f32 %v1268, 0.0
  %v1299 = vmin.f32 %v1273, 0.0
  %v1300 = vmin.f32 %v1278, 0.0
  %v1301 = vmin.f32 %v1283, 0.0
  %v1302 = vmul.f32 %v1294, 1.442695
  %v1303 = vpow.pop %v1302
  %v1304 = vmul.f32 %v1295, 1.442695
  %v1305 = vpow.pop %v1304
  %v1306 = vmul.f32 %v1296, 1.442695
  %v1307 = vpow.pop %v1306
  %v1308 = vmul.f32 %v1297, 1.442695
  %v1309 = vpow.pop %v1308
  %v1310 = vmul.f32 %v1298, 1.442695
  %v1311 = vpow.pop %v1310
  %v1312 = vmul.f32 %v1299, 1.442695
  %v1313 = vpow.pop %v1312
  %v1314 = vmul.f32 %v1300, 1.442695
  %v1315 = vpow.pop %v1314
  %v1316 = vmul.f32 %v1301, 1.442695
  %v1317 = vpow.pop %v1316
  %v1318 = vsub.f32 %v1303, 1.0
  %v1319 = vsub.f32 %v1305, 1.0
  %v1320 = vsub.f32 %v1307, 1.0
  %v1321 = vsub.f32 %v1309, 1.0
  %v1322 = vsub.f32 %v1311, 1.0
  %v1323 = vsub.f32 %v1313, 1.0
  %v1324 = vsub.f32 %v1315, 1.0
  %v1325 = vsub.f32 %v1317, 1.0
  %v1326 = vsel %vm1286, %v1248, %v1318
  %v1327 = vsel %vm1287, %v1253, %v1319
  %v1328 = vsel %vm1288, %v1258, %v1320
  %v1329 = vsel %vm1289, %v1263, %v1321
  %v1330 = vsel %vm1290, %v1268, %v1322
  %v1331 = vsel %vm1291, %v1273, %v1323
  %v1332 = vsel %vm1292, %v1278, %v1324
  %v1333 = vsel %vm1293, %v1283, %v1325
  %v1335 = vlaneseq
  %v1336 = vshrl.u32 %v1335, 7
  %v1337 = vsub.s32 0, %v1336
  %v1338 = vrot.slane %v56, %v1337
  %vm1340 = vcmask 130048
  %v1342 = vsel %vm1340, %v1326, 0
  %v1345 = vsel %vm1340, %v1327, 0
  %v1348 = vsel %vm1340, %v1328, 0
  %v1351 = vsel %vm1340, %v1329, 0
  %v1354 = vsel %vm1340, %v1330, 0
  %v1357 = vsel %vm1340, %v1331, 0
  %v1360 = vsel %vm1340, %v1332, 0
  %v1363 = vsel %vm1340, %v1333, 0
  %1365 = vmatprep.subr.mxu0 0.0
  %1366 = vmatpush1.msra.mxu0 %v54
  %1367 = vmatprep.subr.mxu0 0.0
  %1368 = vmatpush1.msra.mxu0 %v55
  %1369 = vmatprep.subr.mxu0 0.0
  %1370 = vmatpush1.msra.mxu0 0.0
  %1371 = vmatprep.subr.mxu0 0.0
  %1372 = vmatpush1.msra.mxu0 0.0
  %1373 = vmatprep.subr.mxu0 0.0
  %1374 = vmatpush1.msra.mxu0 0.0
  %1375 = vmatprep.subr.mxu0 0.0
  %1376 = vmatpush1.msra.mxu0 0.0
  %1377 = vmatprep.subr.mxu0 0.0
  %1378 = vmatpush1.msra.mxu0 0.0
  %1379 = vmatprep.subr.mxu0 0.0
  %1380 = vmatpush1.msra.mxu0 0.0
  %1381 = vmatprep.subr.mxu0 0.0
  %1382 = vmatpush1.msra.mxu0 0.0
  %1383 = vmatprep.subr.mxu0 0.0
  %1384 = vmatpush1.msra.mxu0 0.0
  %1385 = vmatprep.subr.mxu0 0.0
  %1386 = vmatpush1.msra.mxu0 0.0
  %1387 = vmatprep.subr.mxu0 0.0
  %1388 = vmatpush1.msra.mxu0 0.0
  %1389 = vmatprep.subr.mxu0 0.0
  %1390 = vmatpush1.msra.mxu0 0.0
  %1391 = vmatprep.subr.mxu0 0.0
  %1392 = vmatpush1.msra.mxu0 0.0
  %1393 = vmatprep.subr.mxu0 0.0
  %1394 = vmatpush1.msra.mxu0 0.0
  %1395 = vmatprep.subr.mxu0 0.0
  %1396 = vmatpush1.msra.mxu0 0.0
  %1397 = vmatprep.subr.mxu0 0.0
  %1398 = vmatpush1.msra.mxu0 0.0
  %1399 = vmatprep.subr.mxu0 0.0
  %1400 = vmatpush1.msra.mxu0 0.0
  %1401 = vmatprep.subr.mxu0 0.0
  %1402 = vmatpush1.msra.mxu0 0.0
  %1403 = vmatprep.subr.mxu0 0.0
  %1404 = vmatpush1.msra.mxu0 0.0
  %1405 = vmatprep.subr.mxu0 0.0
  %1406 = vmatpush1.msra.mxu0 0.0
  %1407 = vmatprep.subr.mxu0 0.0
  %1408 = vmatpush1.msra.mxu0 0.0
  %1409 = vmatprep.subr.mxu0 0.0
  %1410 = vmatpush1.msra.mxu0 0.0
  %1411 = vmatprep.subr.mxu0 0.0
  %1412 = vmatpush1.msra.mxu0 0.0
  %1413 = vmatprep.subr.mxu0 0.0
  %1414 = vmatpush1.msra.mxu0 0.0
  %1415 = vmatprep.subr.mxu0 0.0
  %1416 = vmatpush1.msra.mxu0 0.0
  %1417 = vmatprep.subr.mxu0 0.0
  %1418 = vmatpush1.msra.mxu0 0.0
  %1419 = vmatprep.subr.mxu0 0.0
  %1420 = vmatpush1.msra.mxu0 0.0
  %1421 = vmatprep.subr.mxu0 0.0
  %1422 = vmatpush1.msra.mxu0 0.0
  %1423 = vmatprep.subr.mxu0 0.0
  %1424 = vmatpush1.msra.mxu0 0.0
  %1425 = vmatprep.subr.mxu0 0.0
  %1426 = vmatpush1.msra.mxu0 0.0
  %1427 = vmatprep.subr.mxu0 0.0
  %1428 = vmatpush1.msra.mxu0 0.0
  %1429 = vmatprep.mubr.f32.mxu0 0.0
  %1430 = vmatmul.mubr.f32.gmra.mrb[0].mxu0 %v1342
  %v1431 = vpop.f32.mrb[0].mxu0
  %v1432 = vadd.f32 %v1338, %v1431
  %v1433 = vpop.f32.mrb[0].mxu0
  %1434 = vmatprep.mubr.f32.mxu0 0.0
  %1435 = vmatmul.mubr.f32.gmra.mrb[0].mxu0 %v1345
  %v1436 = vpop.f32.mrb[0].mxu0
  %v1437 = vadd.f32 %v1338, %v1436
  %v1438 = vpop.f32.mrb[0].mxu0
  %1439 = vmatprep.mubr.f32.mxu0 0.0
  %1440 = vmatmul.mubr.f32.gmra.mrb[0].mxu0 %v1348
  %v1441 = vpop.f32.mrb[0].mxu0
  %v1442 = vadd.f32 %v1338, %v1441
  %v1443 = vpop.f32.mrb[0].mxu0
  %1444 = vmatprep.mubr.f32.mxu0 0.0
  %1445 = vmatmul.mubr.f32.gmra.mrb[0].mxu0 %v1351
  %v1446 = vpop.f32.mrb[0].mxu0
  %v1447 = vadd.f32 %v1338, %v1446
  %v1448 = vpop.f32.mrb[0].mxu0
  %1449 = vmatprep.mubr.f32.mxu0 0.0
  %1450 = vmatmul.mubr.f32.gmra.mrb[0].mxu0 %v1354
  %v1451 = vpop.f32.mrb[0].mxu0
  %v1452 = vadd.f32 %v1338, %v1451
  %v1453 = vpop.f32.mrb[0].mxu0
  %1454 = vmatprep.mubr.f32.mxu0 0.0
  %1455 = vmatmul.mubr.f32.gmra.mrb[0].mxu0 %v1357
  %v1456 = vpop.f32.mrb[0].mxu0
  %v1457 = vadd.f32 %v1338, %v1456
  %v1458 = vpop.f32.mrb[0].mxu0
  %1459 = vmatprep.mubr.f32.mxu0 0.0
  %1460 = vmatmul.mubr.f32.gmra.mrb[0].mxu0 %v1360
  %v1461 = vpop.f32.mrb[0].mxu0
  %v1462 = vadd.f32 %v1338, %v1461
  %v1463 = vpop.f32.mrb[0].mxu0
  %1464 = vmatprep.mubr.f32.mxu0 0.0
  %1465 = vmatmul.mubr.f32.gmra.mrb[0].mxu0 %v1363
  %v1466 = vpop.f32.mrb[0].mxu0
  %v1467 = vadd.f32 %v1338, %v1466
  %v1468 = vpop.f32.mrb[0].mxu0
  %1469 = vdwg.mxu0
  %vm1470 = vcmask 72704
  %1471 = vst.msk [vmem:[%s8] sm:$0xff] %vm1470, %v1432
  %1472 = vst.msk [vmem:[%s8 + $0x8] sm:$0xff] %vm1470, %v1437
  %1473 = vst.msk [vmem:[%s8 + $0x10] sm:$0xff] %vm1470, %v1442
  %1474 = vst.msk [vmem:[%s8 + $0x18] sm:$0xff] %vm1470, %v1447
  %1475 = vst.msk [vmem:[%s8 + $0x20] sm:$0xff] %vm1470, %v1452
  %1476 = vst.msk [vmem:[%s8 + $0x28] sm:$0xff] %vm1470, %v1457
  %1477 = vst.msk [vmem:[%s8 + $0x30] sm:$0xff] %vm1470, %v1462
  %1478 = vst.msk [vmem:[%s8 + $0x38] sm:$0xff] %vm1470, %v1467
  // Predicated region
  $region34: #{forward.1} parent=0 // pred_check
    _
  $region35: #{forward.1} parent=0 // pred_check_branch
    %1480 = sbr.rel (0) target = $region37
  $region36: #{forward.1} parent=0 // pred_region
    _
  $region37: #{forward.1} parent=0 // pred_fallthru
    _
  // Predicated region
  $region38: #{forward.1} parent=0 // pred_check
    _
  $region39: #{forward.1} parent=0 // pred_check_branch
    %1482 = sbr.rel (0) target = $region41
  $region40: #{forward.1} parent=0 // pred_region
    _
  $region41: #{forward.1} parent=0 // pred_fallthru
    _

</llo_original>
